<compile_context>
chip_gen: v7x
topology: tpu7x:2x2x1
jax: 0.10.0
libtpu: 0.0.40
codegen_flags: <defaults>
</compile_context>

<pallas_src>
import functools
import math

import jax
import jax.numpy as jnp
from jax.experimental import pallas as pl
from jax.experimental.pallas import tpu as pltpu


# ------------------------------ tiling helper -------------------------------

def _pick_tile(full, desired, grain):
    """Largest tile <= desired that is a multiple of `grain` and divides `full`.
    Falls back to the full extent (always legal: block dim == array dim)."""
    if full <= desired or full % grain != 0:
        return full
    t = (min(desired, full) // grain) * grain
    while t >= grain:
        if full % t == 0:
            return t
        t -= grain
    return full


# ------------------------------ Pallas kernels ------------------------------

def _matmul_kernel(x_ref, w_ref, b_ref, o_ref, acc_ref, *, activation):
    """Tiled o = act(x @ w + b). Grid = (M/tm, N/tn, K/tk); f32 accumulator."""
    k = pl.program_id(2)

    @pl.when(k == 0)
    def _():
        acc_ref[...] = jnp.zeros_like(acc_ref)

    acc_ref[...] += jnp.dot(x_ref[...], w_ref[...],
                            preferred_element_type=jnp.float32)

    @pl.when(k == pl.num_programs(2) - 1)
    def _():
        y = acc_ref[...] + b_ref[...].astype(jnp.float32)
        if activation == "gelu":
            # exact erf-GELU (DistilBERT activation), in f32 on the accumulator
            # tile; EUP/VPU work overlaps with the MXU pipeline.
            y = 0.5 * y * (1.0 + jax.lax.erf(y * (1.0 / math.sqrt(2.0))))
        o_ref[...] = y.astype(o_ref.dtype)


def _matmul_res_ln_kernel(x_ref, w_ref, b_ref, r_ref, g_ref, beta_ref,
                          o_ref, acc_ref, *, eps):
    """Tiled o = LayerNorm(x @ w + b + residual). Grid = (M/tm, K/tk); full N
    resident so the row statistics are computed in a single epilogue."""
    k = pl.program_id(1)

    @pl.when(k == 0)
    def _():
        acc_ref[...] = jnp.zeros_like(acc_ref)

    acc_ref[...] += jnp.dot(x_ref[...], w_ref[...],
                            preferred_element_type=jnp.float32)

    @pl.when(k == pl.num_programs(1) - 1)
    def _():
        y = (acc_ref[...] + b_ref[...].astype(jnp.float32)
             + r_ref[...].astype(jnp.float32))
        mu = jnp.mean(y, axis=-1, keepdims=True)
        var = jnp.mean((y - mu) ** 2, axis=-1, keepdims=True)
        inv = jax.lax.rsqrt(var + eps)
        o_ref[...] = ((y - mu) * inv * g_ref[...].astype(jnp.float32)
                      + beta_ref[...].astype(jnp.float32)).astype(o_ref.dtype)


def _layernorm_kernel(x_ref, g_ref, b_ref, o_ref, *, eps):
    """Row-tiled LayerNorm; statistics in f32."""
    x = x_ref[...].astype(jnp.float32)
    mu = jnp.mean(x, axis=-1, keepdims=True)
    var = jnp.mean((x - mu) ** 2, axis=-1, keepdims=True)
    inv = jax.lax.rsqrt(var + eps)
    o_ref[...] = ((x - mu) * inv * g_ref[...].astype(jnp.float32)
                  + b_ref[...].astype(jnp.float32)).astype(o_ref.dtype)


def _attn_kernel(q_ref, k_ref, v_ref, bias_ref, o_ref, *, scale):
    """One batch element per grid step; all H heads packed into that step.
    Scores / softmax in f32, MXU inputs bf16, no explicit K transpose;
    padding mask folded in as an additive bias (0 keep / -1e30 pad)."""
    q = q_ref[0]            # (H, S, Dh)  bf16
    k = k_ref[0]            # (H, S, Dh)  bf16
    v = v_ref[0]            # (H, S, Dh)  bf16
    bias = bias_ref[0]      # (1, S)      f32

    # scores: batch over heads, contract head_dim of both operands (q @ k^T).
    s = jax.lax.dot_general(
        q, k, dimension_numbers=(((2,), (2,)), ((0,), (0,))),
        preferred_element_type=jnp.float32) * scale          # (H, S, S) f32
    s = s + bias[:, None, :]                                 # broadcast over H, rows

    s_max = jnp.max(s, axis=-1, keepdims=True)
    p = jnp.exp(s - s_max)
    denom = jnp.sum(p, axis=-1, keepdims=True)
    p = p * pl.reciprocal(denom, approx=True)                # EUP vrcp slot

    o = jax.lax.dot_general(
        p.astype(v.dtype), v, dimension_numbers=(((2,), (1,)), ((0,), (0,))),
        preferred_element_type=jnp.float32)                  # (H, S, Dh)
    o_ref[0] = o.astype(o_ref.dtype)


# ------------------------------ wrappers ------------------------------------

_ACT_DTYPE = jnp.bfloat16


def linear(x, w, b, activation=None):
    """Tiled, pipelined matmul: act(x @ w + b) -> bf16."""
    m, kdim = x.shape
    n = w.shape[1]
    tm = _pick_tile(m, 256, 8)
    tn = _pick_tile(n, 512, 128)
    tk = _pick_tile(kdim, 512, 128)
    grid = (m // tm, n // tn, kdim // tk)
    return pl.pallas_call(
        functools.partial(_matmul_kernel, activation=activation),
        out_shape=jax.ShapeDtypeStruct((m, n), _ACT_DTYPE),
        grid=grid,
        in_specs=[pl.BlockSpec((tm, tk), lambda i, j, k: (i, k)),
                  pl.BlockSpec((tk, tn), lambda i, j, k: (k, j)),
                  pl.BlockSpec((1, tn), lambda i, j, k: (0, j))],
        out_specs=pl.BlockSpec((tm, tn), lambda i, j, k: (i, j)),
        scratch_shapes=[pltpu.VMEM((tm, tn), jnp.float32)],
        compiler_params=pltpu.CompilerParams(
            dimension_semantics=("parallel", "parallel", "arbitrary")),
    )(x, w, b.reshape(1, n))


def linear_residual_layernorm(x, w, b, residual, g, beta, eps=1e-12):
    """Tiled LayerNorm(x @ w + b + residual) -> bf16. N kept whole for the LN."""
    m, kdim = x.shape
    n = w.shape[1]
    tm = _pick_tile(m, 256, 8)
    tk = _pick_tile(kdim, 512, 128)
    grid = (m // tm, kdim // tk)
    return pl.pallas_call(
        functools.partial(_matmul_res_ln_kernel, eps=eps),
        out_shape=jax.ShapeDtypeStruct((m, n), _ACT_DTYPE),
        grid=grid,
        in_specs=[pl.BlockSpec((tm, tk), lambda i, k: (i, k)),
                  pl.BlockSpec((tk, n), lambda i, k: (k, 0)),
                  pl.BlockSpec((1, n), lambda i, k: (0, 0)),
                  pl.BlockSpec((tm, n), lambda i, k: (i, 0)),
                  pl.BlockSpec((1, n), lambda i, k: (0, 0)),
                  pl.BlockSpec((1, n), lambda i, k: (0, 0))],
        out_specs=pl.BlockSpec((tm, n), lambda i, k: (i, 0)),
        scratch_shapes=[pltpu.VMEM((tm, n), jnp.float32)],
        compiler_params=pltpu.CompilerParams(
            dimension_semantics=("parallel", "arbitrary")),
    )(x, w, b.reshape(1, n), residual, g.reshape(1, n), beta.reshape(1, n))


def layernorm(x, g, b, eps=1e-12):
    m, d = x.shape
    tm = _pick_tile(m, 512, 8)
    return pl.pallas_call(
        functools.partial(_layernorm_kernel, eps=eps),
        out_shape=jax.ShapeDtypeStruct((m, d), _ACT_DTYPE),
        grid=(m // tm,),
        in_specs=[pl.BlockSpec((tm, d), lambda i: (i, 0)),
                  pl.BlockSpec((1, d), lambda i: (0, 0)),
                  pl.BlockSpec((1, d), lambda i: (0, 0))],
        out_specs=pl.BlockSpec((tm, d), lambda i: (i, 0)),
        compiler_params=pltpu.CompilerParams(dimension_semantics=("parallel",)),
    )(x, g.reshape(1, d), b.reshape(1, d))


def attention(q, k, v, mask_bias):
    """q,k,v: [B, H, S, Dh] bf16; mask_bias: [B, 1, S] f32 (0 keep / -1e30 pad)."""
    b, h, s, dh = q.shape
    scale = 1.0 / math.sqrt(dh)
    blk = pl.BlockSpec((1, h, s, dh), lambda i: (i, 0, 0, 0))
    return pl.pallas_call(
        functools.partial(_attn_kernel, scale=scale),
        out_shape=jax.ShapeDtypeStruct((b, h, s, dh), _ACT_DTYPE),
        grid=(b,),
        in_specs=[blk, blk, blk,
                  pl.BlockSpec((1, 1, s), lambda i: (i, 0, 0))],
        out_specs=blk,
        compiler_params=pltpu.CompilerParams(dimension_semantics=("parallel",)),
    )(q, k, v, mask_bias)


# --------------------------- model (glue in JAX) ----------------------------

def init_params(key, *, vocab, max_pos, dim, ffn_dim, n_layers):
    def normal(k, shape):
        return (0.02 * jax.random.normal(k, shape, jnp.float32)).astype(jnp.bfloat16)

    keys = jax.random.split(key, 2 + 4 * n_layers)
    it = iter(keys)
    params = {
        "word_emb": 0.02 * jax.random.normal(next(it), (vocab, dim), jnp.float32),
        "pos_emb": 0.02 * jax.random.normal(next(it), (max_pos, dim), jnp.float32),
        "emb_ln_g": jnp.ones((dim,), jnp.float32),
        "emb_ln_b": jnp.zeros((dim,), jnp.float32),
        "layers": [],
    }
    for _ in range(n_layers):
        layer = {
            # fused Q|K|V projection weights
            "wqkv": normal(next(it), (dim, 3 * dim)),
            "bqkv": jnp.zeros((3 * dim,), jnp.float32),
            "wo": normal(next(it), (dim, dim)), "bo": jnp.zeros((dim,), jnp.float32),
            "sa_ln_g": jnp.ones((dim,), jnp.float32),
            "sa_ln_b": jnp.zeros((dim,), jnp.float32),
            "w1": normal(next(it), (dim, ffn_dim)), "b1": jnp.zeros((ffn_dim,), jnp.float32),
            "w2": normal(next(it), (ffn_dim, dim)), "b2": jnp.zeros((dim,), jnp.float32),
            "out_ln_g": jnp.ones((dim,), jnp.float32),
            "out_ln_b": jnp.zeros((dim,), jnp.float32),
        }
        params["layers"].append(layer)
    return params


def text_encoder_forward(params, input_ids, attention_mask, *, n_heads):
    B, S = input_ids.shape
    D = params["word_emb"].shape[1]
    Dh = D // n_heads
    M = B * S

    # embeddings: word + position, then LayerNorm (dropout = identity)
    # TODO(synk): embedding gather stays as XLA jnp.take (no clean Pallas gather here).
    h = jnp.take(params["word_emb"], input_ids, axis=0)            # [B, S, D] f32
    h = h + params["pos_emb"][:S][None, :, :]
    h2d = layernorm(h.reshape(M, D),
                    params["emb_ln_g"], params["emb_ln_b"])        # [M, D] bf16

    # additive attention bias per batch element (0 keep / -1e30 pad), read
    # once per attention grid step — one VPU add inside the kernel.
    mask_bias = ((attention_mask.astype(jnp.float32) - 1.0) * 1e30).reshape(B, 1, S)

    for lyr in params["layers"]:
        x2d = h2d                                                  # [M, D] bf16

        # --- multi-head self-attention block ---
        qkv = linear(x2d, lyr["wqkv"], lyr["bqkv"])                # [M, 3D] bf16
        qkv = (qkv.reshape(B, S, 3, n_heads, Dh)
                  .transpose(2, 0, 3, 1, 4))                       # (3, B, H, S, Dh)
        ctx = attention(qkv[0], qkv[1], qkv[2], mask_bias)         # [B, H, S, Dh]
        ctx2d = ctx.transpose(0, 2, 1, 3).reshape(M, D)            # [M, D] bf16
        h2d = linear_residual_layernorm(ctx2d, lyr["wo"], lyr["bo"], x2d,
                                        lyr["sa_ln_g"], lyr["sa_ln_b"])

        # --- feed-forward block (GELU fused into the W1 matmul epilogue) ---
        f = linear(h2d, lyr["w1"], lyr["b1"], activation="gelu")   # [M, F] bf16
        h2d = linear_residual_layernorm(f, lyr["w2"], lyr["b2"], h2d,
                                        lyr["out_ln_g"], lyr["out_ln_b"])

    h = h2d.reshape(B, S, D)
    # TextEncoder.forward: last_hidden_state[:, target_token_idx=0, :]
    return h[:, 0, :].astype(jnp.float32)


# ---------------------------------- main -------------------------------------

if __name__ == "__main__":
    # small synthetic DistilBERT config
    B, S = 2, 8
    VOCAB, MAX_POS = 100, 16
    DIM, HEADS, FFN, LAYERS = 32, 4, 64, 2

    key = jax.random.PRNGKey(0)
    pkey, ikey = jax.random.split(key)

    params = init_params(pkey, vocab=VOCAB, max_pos=MAX_POS,
                         dim=DIM, ffn_dim=FFN, n_layers=LAYERS)

    input_ids = jax.random.randint(ikey, (B, S), 0, VOCAB, dtype=jnp.int32)
    attention_mask = jnp.ones((B, S), jnp.int32).at[1, 5:].set(0)  # pad tail of sample 1

    fwd = jax.jit(functools.partial(text_encoder_forward, n_heads=HEADS))
    out = jax.block_until_ready(fwd(params, input_ids, attention_mask))

    assert out.shape == (B, DIM), out.shape
    assert out.dtype == jnp.float32
    assert bool(jnp.all(jnp.isfinite(out)))
    print("KERNEL_OK")
</pallas_src>

<mosaic_0001>
module attributes {stable_mosaic.version = 11 : i64} {
  func.func @_matmul_kernel(%arg0: i32, %arg1: i32, %arg2: i32, %arg3: memref<16x32xbf16, #tpu.memory_space<vmem>>, %arg4: memref<32x96xbf16, #tpu.memory_space<vmem>>, %arg5: memref<1x96xf32, #tpu.memory_space<vmem>>, %arg6: memref<16x96xbf16, #tpu.memory_space<vmem>>, %arg7: memref<16x96xf32, #tpu.memory_space<vmem>>) attributes {dimension_semantics = [#tpu.dimension_semantics<parallel>, #tpu.dimension_semantics<parallel>, #tpu.dimension_semantics<arbitrary>], iteration_bounds = array<i64: 1, 1, 1>, scalar_prefetch = 0 : i64, scratch_operands = 1 : i64, tpu.core_type = #tpu.core_type<tc>, window_params = [{transform_indices = @transform_0, window_bounds = array<i64: 16, 32>}, {transform_indices = @transform_1, window_bounds = array<i64: 32, 96>}, {transform_indices = @transform_2, window_bounds = array<i64: 1, 96>}, {transform_indices = @transform_3, window_bounds = array<i64: 16, 96>}]} {
    %c0_i32 = arith.constant 0 : i32
    %0 = arith.cmpi eq, %arg2, %c0_i32 : i32
    %1 = arith.extui %0 : i1 to i32
    %c0_i32_0 = arith.constant 0 : i32
    %2 = arith.cmpi ne, %1, %c0_i32_0 : i32
    scf.if %2 {
      %cst_10 = arith.constant 0.000000e+00 : f32
      %12 = vector.broadcast %cst_10 : f32 to vector<16x96xf32>
      %c0_11 = arith.constant 0 : index
      %c0_12 = arith.constant 0 : index
      %13 = vector.load %arg7[%c0_11, %c0_12] : memref<16x96xf32, #tpu.memory_space<vmem>>, vector<16x96xf32>
      tpu.vector_store %arg7[%c0_11, %c0_12], %12 {strides = array<i32>} : memref<16x96xf32, #tpu.memory_space<vmem>>, vector<16x96xf32>,
    } else {
    }
    %c0 = arith.constant 0 : index
    %c0_1 = arith.constant 0 : index
    %3 = vector.load %arg7[%c0, %c0_1] : memref<16x96xf32, #tpu.memory_space<vmem>>, vector<16x96xf32>
    %c0_2 = arith.constant 0 : index
    %c0_3 = arith.constant 0 : index
    %4 = vector.load %arg3[%c0_2, %c0_3] : memref<16x32xbf16, #tpu.memory_space<vmem>>, vector<16x32xbf16>
    %c0_4 = arith.constant 0 : index
    %c0_5 = arith.constant 0 : index
    %5 = vector.load %arg4[%c0_4, %c0_5] : memref<32x96xbf16, #tpu.memory_space<vmem>>, vector<32x96xbf16>
    %cst = arith.constant dense<0.000000e+00> : vector<16x96xf32>
    %6 = tpu.matmul %4, %5, %cst {dimension_numbers = #tpu.dot_dimension_numbers<[1], [0], [0], [1], [0, 0, 1, 1], [], []>} : vector<16x32xbf16>, vector<32x96xbf16>, vector<16x96xf32> -> vector<16x96xf32>
    %7 = arith.addf %3, %6 : vector<16x96xf32>
    %c0_6 = arith.constant 0 : index
    %c0_7 = arith.constant 0 : index
    %8 = vector.load %arg7[%c0_6, %c0_7] : memref<16x96xf32, #tpu.memory_space<vmem>>, vector<16x96xf32>
    tpu.vector_store %arg7[%c0_6, %c0_7], %7 {strides = array<i32>} : memref<16x96xf32, #tpu.memory_space<vmem>>, vector<16x96xf32>,
    %c0_i32_8 = arith.constant 0 : i32
    %9 = arith.cmpi eq, %arg2, %c0_i32_8 : i32
    %10 = arith.extui %9 : i1 to i32
    %c0_i32_9 = arith.constant 0 : i32
    %11 = arith.cmpi ne, %10, %c0_i32_9 : i32
    scf.if %11 {
      %c0_10 = arith.constant 0 : index
      %c0_11 = arith.constant 0 : index
      %12 = vector.load %arg7[%c0_10, %c0_11] : memref<16x96xf32, #tpu.memory_space<vmem>>, vector<16x96xf32>
      %c0_12 = arith.constant 0 : index
      %c0_13 = arith.constant 0 : index
      %13 = vector.load %arg5[%c0_12, %c0_13] : memref<1x96xf32, #tpu.memory_space<vmem>>, vector<1x96xf32>
      %14 = vector.broadcast %13 : vector<1x96xf32> to vector<16x96xf32>
      %15 = arith.addf %12, %14 : vector<16x96xf32>
      %16 = arith.truncf %15 : vector<16x96xf32> to vector<16x96xbf16>
      %c0_14 = arith.constant 0 : index
      %c0_15 = arith.constant 0 : index
      %17 = vector.load %arg6[%c0_14, %c0_15] : memref<16x96xbf16, #tpu.memory_space<vmem>>, vector<16x96xbf16>
      tpu.vector_store %arg6[%c0_14, %c0_15], %16 {strides = array<i32>} : memref<16x96xbf16, #tpu.memory_space<vmem>>, vector<16x96xbf16>,
    } else {
    }
    return
  }
  func.func @transform_0(%arg0: i32, %arg1: i32, %arg2: i32) -> (i32, i32) {
    %c0_i32 = arith.constant 0 : i32
    return %arg0, %arg2 : i32, i32
  }
  func.func @transform_1(%arg0: i32, %arg1: i32, %arg2: i32) -> (i32, i32) {
    %c0_i32 = arith.constant 0 : i32
    return %arg2, %arg1 : i32, i32
  }
  func.func @transform_2(%arg0: i32, %arg1: i32, %arg2: i32) -> (i32, i32) {
    %c0_i32 = arith.constant 0 : i32
    %c0_i32_0 = arith.constant 0 : i32
    return %c0_i32, %arg1 : i32, i32
  }
  func.func @transform_3(%arg0: i32, %arg1: i32, %arg2: i32) -> (i32, i32) {
    %c0_i32 = arith.constant 0 : i32
    return %arg0, %arg1 : i32, i32
  }
}

module attributes {stable_mosaic.version = 11 : i64} {
  func.func @_layernorm_kernel(%arg0: i32, %arg1: memref<16x32xf32, #tpu.memory_space<vmem>>, %arg2: memref<1x32xf32, #tpu.memory_space<vmem>>, %arg3: memref<1x32xf32, #tpu.memory_space<vmem>>, %arg4: memref<16x32xbf16, #tpu.memory_space<vmem>>) attributes {dimension_semantics = [#tpu.dimension_semantics<parallel>], iteration_bounds = array<i64: 1>, scalar_prefetch = 0 : i64, scratch_operands = 0 : i64, tpu.core_type = #tpu.core_type<tc>, window_params = [{transform_indices = @transform_0, window_bounds = array<i64: 16, 32>}, {pipeline_mode = #tpu.pipeline_mode<synchronous>, transform_indices = @transform_1, window_bounds = array<i64: 1, 32>}, {pipeline_mode = #tpu.pipeline_mode<synchronous>, transform_indices = @transform_2, window_bounds = array<i64: 1, 32>}, {transform_indices = @transform_3, window_bounds = array<i64: 16, 32>}]} {
    %c0 = arith.constant 0 : index
    %c0_0 = arith.constant 0 : index
    %0 = vector.load %arg1[%c0, %c0_0] : memref<16x32xf32, #tpu.memory_space<vmem>>, vector<16x32xf32>
    %cst = arith.constant dense<0.000000e+00> : vector<16xf32>
    %1 = vector.multi_reduction <add>, %0, %cst [1] : vector<16x32xf32> to vector<16xf32>
    %2 = vector.shape_cast %1 : vector<16xf32> to vector<16x1xf32>
    %cst_1 = arith.constant 3.200000e+01 : f32
    %3 = vector.broadcast %cst_1 : f32 to vector<16x1xf32>
    %4 = arith.divf %2, %3 : vector<16x1xf32>
    %5 = vector.broadcast %4 : vector<16x1xf32> to vector<16x32xf32>
    %6 = arith.subf %0, %5 : vector<16x32xf32>
    %7 = arith.mulf %6, %6 : vector<16x32xf32>
    %cst_2 = arith.constant dense<0.000000e+00> : vector<16xf32>
    %8 = vector.multi_reduction <add>, %7, %cst_2 [1] : vector<16x32xf32> to vector<16xf32>
    %9 = vector.shape_cast %8 : vector<16xf32> to vector<16x1xf32>
    %cst_3 = arith.constant 3.200000e+01 : f32
    %10 = vector.broadcast %cst_3 : f32 to vector<16x1xf32>
    %11 = arith.divf %9, %10 : vector<16x1xf32>
    %cst_4 = arith.constant 9.99999996E-13 : f32
    %12 = vector.broadcast %cst_4 : f32 to vector<16x1xf32>
    %13 = arith.addf %11, %12 : vector<16x1xf32>
    %14 = math.rsqrt %13 : vector<16x1xf32>
    %15 = vector.broadcast %4 : vector<16x1xf32> to vector<16x32xf32>
    %16 = arith.subf %0, %15 : vector<16x32xf32>
    %17 = vector.broadcast %14 : vector<16x1xf32> to vector<16x32xf32>
    %18 = arith.mulf %16, %17 : vector<16x32xf32>
    %c0_5 = arith.constant 0 : index
    %c0_6 = arith.constant 0 : index
    %19 = vector.load %arg2[%c0_5, %c0_6] : memref<1x32xf32, #tpu.memory_space<vmem>>, vector<1x32xf32>
    %20 = vector.broadcast %19 : vector<1x32xf32> to vector<16x32xf32>
    %21 = arith.mulf %18, %20 : vector<16x32xf32>
    %c0_7 = arith.constant 0 : index
    %c0_8 = arith.constant 0 : index
    %22 = vector.load %arg3[%c0_7, %c0_8] : memref<1x32xf32, #tpu.memory_space<vmem>>, vector<1x32xf32>
    %23 = vector.broadcast %22 : vector<1x32xf32> to vector<16x32xf32>
    %24 = arith.addf %21, %23 : vector<16x32xf32>
    %25 = arith.truncf %24 : vector<16x32xf32> to vector<16x32xbf16>
    %c0_9 = arith.constant 0 : index
    %c0_10 = arith.constant 0 : index
    %26 = vector.load %arg4[%c0_9, %c0_10] : memref<16x32xbf16, #tpu.memory_space<vmem>>, vector<16x32xbf16>
    tpu.vector_store %arg4[%c0_9, %c0_10], %25 {strides = array<i32>} : memref<16x32xbf16, #tpu.memory_space<vmem>>, vector<16x32xbf16>,
    return
  }
  func.func @transform_0(%arg0: i32) -> (i32, i32) {
    %c0_i32 = arith.constant 0 : i32
    %c0_i32_0 = arith.constant 0 : i32
    return %arg0, %c0_i32 : i32, i32
  }
  func.func @transform_1(%arg0: i32) -> (i32, i32) {
    %c0_i32 = arith.constant 0 : i32
    %c0_i32_0 = arith.constant 0 : i32
    %c0_i32_1 = arith.constant 0 : i32
    return %c0_i32, %c0_i32_0 : i32, i32
  }
  func.func @transform_2(%arg0: i32) -> (i32, i32) {
    %c0_i32 = arith.constant 0 : i32
    %c0_i32_0 = arith.constant 0 : i32
    %c0_i32_1 = arith.constant 0 : i32
    return %c0_i32, %c0_i32_0 : i32, i32
  }
  func.func @transform_3(%arg0: i32) -> (i32, i32) {
    %c0_i32 = arith.constant 0 : i32
    %c0_i32_0 = arith.constant 0 : i32
    return %arg0, %c0_i32 : i32, i32
  }
}

module attributes {stable_mosaic.version = 11 : i64} {
  func.func @_attn_kernel(%arg0: i32, %arg1: memref<1x4x8x8xbf16, #tpu.memory_space<vmem>>, %arg2: memref<1x4x8x8xbf16, #tpu.memory_space<vmem>>, %arg3: memref<1x4x8x8xbf16, #tpu.memory_space<vmem>>, %arg4: memref<1x1x8xf32, #tpu.memory_space<vmem>>, %arg5: memref<1x4x8x8xbf16, #tpu.memory_space<vmem>>) attributes {dimension_semantics = [#tpu.dimension_semantics<parallel>], iteration_bounds = array<i64: 2>, scalar_prefetch = 0 : i64, scratch_operands = 0 : i64, tpu.core_type = #tpu.core_type<tc>, window_params = [{transform_indices = @transform_0, window_bounds = array<i64: 1, 4, 8, 8>}, {transform_indices = @transform_1, window_bounds = array<i64: 1, 4, 8, 8>}, {transform_indices = @transform_2, window_bounds = array<i64: 1, 4, 8, 8>}, {transform_indices = @transform_3, window_bounds = array<i64: 1, 1, 8>}, {transform_indices = @transform_4, window_bounds = array<i64: 1, 4, 8, 8>}]} {
    %c0 = arith.constant 0 : index
    %c0_0 = arith.constant 0 : index
    %c0_1 = arith.constant 0 : index
    %c0_2 = arith.constant 0 : index
    %0 = vector.load %arg1[%c0, %c0_0, %c0_1, %c0_2] : memref<1x4x8x8xbf16, #tpu.memory_space<vmem>>, vector<1x4x8x8xbf16>
    %1 = vector.shape_cast %0 : vector<1x4x8x8xbf16> to vector<4x8x8xbf16>
    %c0_3 = arith.constant 0 : index
    %c0_4 = arith.constant 0 : index
    %c0_5 = arith.constant 0 : index
    %c0_6 = arith.constant 0 : index
    %2 = vector.load %arg2[%c0_3, %c0_4, %c0_5, %c0_6] : memref<1x4x8x8xbf16, #tpu.memory_space<vmem>>, vector<1x4x8x8xbf16>
    %3 = vector.shape_cast %2 : vector<1x4x8x8xbf16> to vector<4x8x8xbf16>
    %c0_7 = arith.constant 0 : index
    %c0_8 = arith.constant 0 : index
    %c0_9 = arith.constant 0 : index
    %c0_10 = arith.constant 0 : index
    %4 = vector.load %arg3[%c0_7, %c0_8, %c0_9, %c0_10] : memref<1x4x8x8xbf16, #tpu.memory_space<vmem>>, vector<1x4x8x8xbf16>
    %5 = vector.shape_cast %4 : vector<1x4x8x8xbf16> to vector<4x8x8xbf16>
    %c0_11 = arith.constant 0 : index
    %c0_12 = arith.constant 0 : index
    %c0_13 = arith.constant 0 : index
    %6 = vector.load %arg4[%c0_11, %c0_12, %c0_13] : memref<1x1x8xf32, #tpu.memory_space<vmem>>, vector<1x1x8xf32>
    %7 = vector.shape_cast %6 : vector<1x1x8xf32> to vector<1x8xf32>
    %cst = arith.constant dense<0.000000e+00> : vector<4x8x8xf32>
    %8 = tpu.matmul %1, %3, %cst {dimension_numbers = #tpu.dot_dimension_numbers<[2], [2], [1], [1], [0, 0, 0, 1, 1, 1], [0], [0]>} : vector<4x8x8xbf16>, vector<4x8x8xbf16>, vector<4x8x8xf32> -> vector<4x8x8xf32>
    %cst_14 = arith.constant 0.353553385 : f32
    %9 = vector.broadcast %cst_14 : f32 to vector<4x8x8xf32>
    %10 = arith.mulf %8, %9 : vector<4x8x8xf32>
    %11 = vector.shape_cast %7 : vector<1x8xf32> to vector<1x1x8xf32>
    %12 = vector.broadcast %11 : vector<1x1x8xf32> to vector<4x8x8xf32>
    %13 = arith.addf %10, %12 : vector<4x8x8xf32>
    %cst_15 = arith.constant dense<0xFF800000> : vector<4x8xf32>
    %14 = vector.multi_reduction <maximumf>, %13, %cst_15 [2] : vector<4x8x8xf32> to vector<4x8xf32>
    %15 = vector.shape_cast %14 : vector<4x8xf32> to vector<4x8x1xf32>
    %16 = vector.broadcast %15 : vector<4x8x1xf32> to vector<4x8x8xf32>
    %17 = arith.subf %13, %16 : vector<4x8x8xf32>
    %18 = math.exp %17 : vector<4x8x8xf32>
    %cst_16 = arith.constant dense<0.000000e+00> : vector<4x8xf32>
    %19 = vector.multi_reduction <add>, %18, %cst_16 [2] : vector<4x8x8xf32> to vector<4x8xf32>
    %20 = vector.shape_cast %19 : vector<4x8xf32> to vector<4x8x1xf32>
    %21 = tpu.reciprocal %20 {approx = true} : vector<4x8x1xf32> -> vector<4x8x1xf32>
    %22 = vector.broadcast %21 : vector<4x8x1xf32> to vector<4x8x8xf32>
    %23 = arith.mulf %18, %22 : vector<4x8x8xf32>
    %24 = arith.truncf %23 : vector<4x8x8xf32> to vector<4x8x8xbf16>
    %cst_17 = arith.constant dense<0.000000e+00> : vector<4x8x8xf32>
    %25 = tpu.matmul %24, %5, %cst_17 {dimension_numbers = #tpu.dot_dimension_numbers<[2], [1], [1], [2], [0, 0, 0, 1, 1, 2], [0], [0]>} : vector<4x8x8xbf16>, vector<4x8x8xbf16>, vector<4x8x8xf32> -> vector<4x8x8xf32>
    %26 = arith.truncf %25 : vector<4x8x8xf32> to vector<4x8x8xbf16>
    %c0_18 = arith.constant 0 : index
    %c0_19 = arith.constant 0 : index
    %c0_20 = arith.constant 0 : index
    %c0_21 = arith.constant 0 : index
    %27 = vector.load %arg5[%c0_18, %c0_19, %c0_20, %c0_21] : memref<1x4x8x8xbf16, #tpu.memory_space<vmem>>, vector<1x4x8x8xbf16>
    %28 = vector.shape_cast %27 : vector<1x4x8x8xbf16> to vector<4x8x8xbf16>
    %29 = vector.shape_cast %26 : vector<4x8x8xbf16> to vector<1x4x8x8xbf16>
    tpu.vector_store %arg5[%c0_18, %c0_19, %c0_20, %c0_21], %29 {strides = array<i32>} : memref<1x4x8x8xbf16, #tpu.memory_space<vmem>>, vector<1x4x8x8xbf16>,
    return
  }
  func.func @transform_0(%arg0: i32) -> (i32, i32, i32, i32) {
    %c0_i32 = arith.constant 0 : i32
    %c0_i32_0 = arith.constant 0 : i32
    %c0_i32_1 = arith.constant 0 : i32
    %c0_i32_2 = arith.constant 0 : i32
    return %arg0, %c0_i32, %c0_i32_0, %c0_i32_1 : i32, i32, i32, i32
  }
  func.func @transform_1(%arg0: i32) -> (i32, i32, i32, i32) {
    %c0_i32 = arith.constant 0 : i32
    %c0_i32_0 = arith.constant 0 : i32
    %c0_i32_1 = arith.constant 0 : i32
    %c0_i32_2 = arith.constant 0 : i32
    return %arg0, %c0_i32, %c0_i32_0, %c0_i32_1 : i32, i32, i32, i32
  }
  func.func @transform_2(%arg0: i32) -> (i32, i32, i32, i32) {
    %c0_i32 = arith.constant 0 : i32
    %c0_i32_0 = arith.constant 0 : i32
    %c0_i32_1 = arith.constant 0 : i32
    %c0_i32_2 = arith.constant 0 : i32
    return %arg0, %c0_i32, %c0_i32_0, %c0_i32_1 : i32, i32, i32, i32
  }
  func.func @transform_3(%arg0: i32) -> (i32, i32, i32) {
    %c0_i32 = arith.constant 0 : i32
    %c0_i32_0 = arith.constant 0 : i32
    %c0_i32_1 = arith.constant 0 : i32
    return %arg0, %c0_i32, %c0_i32_0 : i32, i32, i32
  }
  func.func @transform_4(%arg0: i32) -> (i32, i32, i32, i32) {
    %c0_i32 = arith.constant 0 : i32
    %c0_i32_0 = arith.constant 0 : i32
    %c0_i32_1 = arith.constant 0 : i32
    %c0_i32_2 = arith.constant 0 : i32
    return %arg0, %c0_i32, %c0_i32_0, %c0_i32_1 : i32, i32, i32, i32
  }
}

module attributes {stable_mosaic.version = 11 : i64} {
  func.func @_matmul_res_ln_kernel(%arg0: i32, %arg1: i32, %arg2: memref<16x32xbf16, #tpu.memory_space<vmem>>, %arg3: memref<32x32xbf16, #tpu.memory_space<vmem>>, %arg4: memref<1x32xf32, #tpu.memory_space<vmem>>, %arg5: memref<16x32xbf16, #tpu.memory_space<vmem>>, %arg6: memref<1x32xf32, #tpu.memory_space<vmem>>, %arg7: memref<1x32xf32, #tpu.memory_space<vmem>>, %arg8: memref<16x32xbf16, #tpu.memory_space<vmem>>, %arg9: memref<16x32xf32, #tpu.memory_space<vmem>>) attributes {dimension_semantics = [#tpu.dimension_semantics<parallel>, #tpu.dimension_semantics<arbitrary>], iteration_bounds = array<i64: 1, 1>, scalar_prefetch = 0 : i64, scratch_operands = 1 : i64, tpu.core_type = #tpu.core_type<tc>, window_params = [{transform_indices = @transform_0, window_bounds = array<i64: 16, 32>}, {transform_indices = @transform_1, window_bounds = array<i64: 32, 32>}, {pipeline_mode = #tpu.pipeline_mode<synchronous>, transform_indices = @transform_2, window_bounds = array<i64: 1, 32>}, {transform_indices = @transform_3, window_bounds = array<i64: 16, 32>}, {pipeline_mode = #tpu.pipeline_mode<synchronous>, transform_indices = @transform_4, window_bounds = array<i64: 1, 32>}, {pipeline_mode = #tpu.pipeline_mode<synchronous>, transform_indices = @transform_5, window_bounds = array<i64: 1, 32>}, {transform_indices = @transform_6, window_bounds = array<i64: 16, 32>}]} {
    %c0_i32 = arith.constant 0 : i32
    %0 = arith.cmpi eq, %arg1, %c0_i32 : i32
    %1 = arith.extui %0 : i1 to i32
    %c0_i32_0 = arith.constant 0 : i32
    %2 = arith.cmpi ne, %1, %c0_i32_0 : i32
    scf.if %2 {
      %cst_10 = arith.constant 0.000000e+00 : f32
      %12 = vector.broadcast %cst_10 : f32 to vector<16x32xf32>
      %c0_11 = arith.constant 0 : index
      %c0_12 = arith.constant 0 : index
      %13 = vector.load %arg9[%c0_11, %c0_12] : memref<16x32xf32, #tpu.memory_space<vmem>>, vector<16x32xf32>
      tpu.vector_store %arg9[%c0_11, %c0_12], %12 {strides = array<i32>} : memref<16x32xf32, #tpu.memory_space<vmem>>, vector<16x32xf32>,
    } else {
    }
    %c0 = arith.constant 0 : index
    %c0_1 = arith.constant 0 : index
    %3 = vector.load %arg9[%c0, %c0_1] : memref<16x32xf32, #tpu.memory_space<vmem>>, vector<16x32xf32>
    %c0_2 = arith.constant 0 : index
    %c0_3 = arith.constant 0 : index
    %4 = vector.load %arg2[%c0_2, %c0_3] : memref<16x32xbf16, #tpu.memory_space<vmem>>, vector<16x32xbf16>
    %c0_4 = arith.constant 0 : index
    %c0_5 = arith.constant 0 : index
    %5 = vector.load %arg3[%c0_4, %c0_5] : memref<32x32xbf16, #tpu.memory_space<vmem>>, vector<32x32xbf16>
    %cst = arith.constant dense<0.000000e+00> : vector<16x32xf32>
    %6 = tpu.matmul %4, %5, %cst {dimension_numbers = #tpu.dot_dimension_numbers<[1], [0], [0], [1], [0, 0, 1, 1], [], []>} : vector<16x32xbf16>, vector<32x32xbf16>, vector<16x32xf32> -> vector<16x32xf32>
    %7 = arith.addf %3, %6 : vector<16x32xf32>
    %c0_6 = arith.constant 0 : index
    %c0_7 = arith.constant 0 : index
    %8 = vector.load %arg9[%c0_6, %c0_7] : memref<16x32xf32, #tpu.memory_space<vmem>>, vector<16x32xf32>
    tpu.vector_store %arg9[%c0_6, %c0_7], %7 {strides = array<i32>} : memref<16x32xf32, #tpu.memory_space<vmem>>, vector<16x32xf32>,
    %c0_i32_8 = arith.constant 0 : i32
    %9 = arith.cmpi eq, %arg1, %c0_i32_8 : i32
    %10 = arith.extui %9 : i1 to i32
    %c0_i32_9 = arith.constant 0 : i32
    %11 = arith.cmpi ne, %10, %c0_i32_9 : i32
    scf.if %11 {
      %c0_10 = arith.constant 0 : index
      %c0_11 = arith.constant 0 : index
      %12 = vector.load %arg9[%c0_10, %c0_11] : memref<16x32xf32, #tpu.memory_space<vmem>>, vector<16x32xf32>
      %c0_12 = arith.constant 0 : index
      %c0_13 = arith.constant 0 : index
      %13 = vector.load %arg4[%c0_12, %c0_13] : memref<1x32xf32, #tpu.memory_space<vmem>>, vector<1x32xf32>
      %14 = vector.broadcast %13 : vector<1x32xf32> to vector<16x32xf32>
      %15 = arith.addf %12, %14 : vector<16x32xf32>
      %c0_14 = arith.constant 0 : index
      %c0_15 = arith.constant 0 : index
      %16 = vector.load %arg5[%c0_14, %c0_15] : memref<16x32xbf16, #tpu.memory_space<vmem>>, vector<16x32xbf16>
      %17 = arith.extf %16 : vector<16x32xbf16> to vector<16x32xf32>
      %18 = arith.addf %15, %17 : vector<16x32xf32>
      %cst_16 = arith.constant dense<0.000000e+00> : vector<16xf32>
      %19 = vector.multi_reduction <add>, %18, %cst_16 [1] : vector<16x32xf32> to vector<16xf32>
      %20 = vector.shape_cast %19 : vector<16xf32> to vector<16x1xf32>
      %cst_17 = arith.constant 3.200000e+01 : f32
      %21 = vector.broadcast %cst_17 : f32 to vector<16x1xf32>
      %22 = arith.divf %20, %21 : vector<16x1xf32>
      %23 = vector.broadcast %22 : vector<16x1xf32> to vector<16x32xf32>
      %24 = arith.subf %18, %23 : vector<16x32xf32>
      %25 = arith.mulf %24, %24 : vector<16x32xf32>
      %cst_18 = arith.constant dense<0.000000e+00> : vector<16xf32>
      %26 = vector.multi_reduction <add>, %25, %cst_18 [1] : vector<16x32xf32> to vector<16xf32>
      %27 = vector.shape_cast %26 : vector<16xf32> to vector<16x1xf32>
      %cst_19 = arith.constant 3.200000e+01 : f32
      %28 = vector.broadcast %cst_19 : f32 to vector<16x1xf32>
      %29 = arith.divf %27, %28 : vector<16x1xf32>
      %cst_20 = arith.constant 9.99999996E-13 : f32
      %30 = vector.broadcast %cst_20 : f32 to vector<16x1xf32>
      %31 = arith.addf %29, %30 : vector<16x1xf32>
      %32 = math.rsqrt %31 : vector<16x1xf32>
      %33 = vector.broadcast %22 : vector<16x1xf32> to vector<16x32xf32>
      %34 = arith.subf %18, %33 : vector<16x32xf32>
      %35 = vector.broadcast %32 : vector<16x1xf32> to vector<16x32xf32>
      %36 = arith.mulf %34, %35 : vector<16x32xf32>
      %c0_21 = arith.constant 0 : index
      %c0_22 = arith.constant 0 : index
      %37 = vector.load %arg6[%c0_21, %c0_22] : memref<1x32xf32, #tpu.memory_space<vmem>>, vector<1x32xf32>
      %38 = vector.broadcast %37 : vector<1x32xf32> to vector<16x32xf32>
      %39 = arith.mulf %36, %38 : vector<16x32xf32>
      %c0_23 = arith.constant 0 : index
      %c0_24 = arith.constant 0 : index
      %40 = vector.load %arg7[%c0_23, %c0_24] : memref<1x32xf32, #tpu.memory_space<vmem>>, vector<1x32xf32>
      %41 = vector.broadcast %40 : vector<1x32xf32> to vector<16x32xf32>
      %42 = arith.addf %39, %41 : vector<16x32xf32>
      %43 = arith.truncf %42 : vector<16x32xf32> to vector<16x32xbf16>
      %c0_25 = arith.constant 0 : index
      %c0_26 = arith.constant 0 : index
      %44 = vector.load %arg8[%c0_25, %c0_26] : memref<16x32xbf16, #tpu.memory_space<vmem>>, vector<16x32xbf16>
      tpu.vector_store %arg8[%c0_25, %c0_26], %43 {strides = array<i32>} : memref<16x32xbf16, #tpu.memory_space<vmem>>, vector<16x32xbf16>,
    } else {
    }
    return
  }
  func.func @transform_0(%arg0: i32, %arg1: i32) -> (i32, i32) {
    %c0_i32 = arith.constant 0 : i32
    return %arg0, %arg1 : i32, i32
  }
  func.func @transform_1(%arg0: i32, %arg1: i32) -> (i32, i32) {
    %c0_i32 = arith.constant 0 : i32
    %c0_i32_0 = arith.constant 0 : i32
    return %arg1, %c0_i32 : i32, i32
  }
  func.func @transform_2(%arg0: i32, %arg1: i32) -> (i32, i32) {
    %c0_i32 = arith.constant 0 : i32
    %c0_i32_0 = arith.constant 0 : i32
    %c0_i32_1 = arith.constant 0 : i32
    return %c0_i32, %c0_i32_0 : i32, i32
  }
  func.func @transform_3(%arg0: i32, %arg1: i32) -> (i32, i32) {
    %c0_i32 = arith.constant 0 : i32
    %c0_i32_0 = arith.constant 0 : i32
    return %arg0, %c0_i32 : i32, i32
  }
  func.func @transform_4(%arg0: i32, %arg1: i32) -> (i32, i32) {
    %c0_i32 = arith.constant 0 : i32
    %c0_i32_0 = arith.constant 0 : i32
    %c0_i32_1 = arith.constant 0 : i32
    return %c0_i32, %c0_i32_0 : i32, i32
  }
  func.func @transform_5(%arg0: i32, %arg1: i32) -> (i32, i32) {
    %c0_i32 = arith.constant 0 : i32
    %c0_i32_0 = arith.constant 0 : i32
    %c0_i32_1 = arith.constant 0 : i32
    return %c0_i32, %c0_i32_0 : i32, i32
  }
  func.func @transform_6(%arg0: i32, %arg1: i32) -> (i32, i32) {
    %c0_i32 = arith.constant 0 : i32
    %c0_i32_0 = arith.constant 0 : i32
    return %arg0, %c0_i32 : i32, i32
  }
}

module attributes {stable_mosaic.version = 11 : i64} {
  func.func @_matmul_kernel(%arg0: i32, %arg1: i32, %arg2: i32, %arg3: memref<16x32xbf16, #tpu.memory_space<vmem>>, %arg4: memref<32x64xbf16, #tpu.memory_space<vmem>>, %arg5: memref<1x64xf32, #tpu.memory_space<vmem>>, %arg6: memref<16x64xbf16, #tpu.memory_space<vmem>>, %arg7: memref<16x64xf32, #tpu.memory_space<vmem>>) attributes {dimension_semantics = [#tpu.dimension_semantics<parallel>, #tpu.dimension_semantics<parallel>, #tpu.dimension_semantics<arbitrary>], iteration_bounds = array<i64: 1, 1, 1>, scalar_prefetch = 0 : i64, scratch_operands = 1 : i64, tpu.core_type = #tpu.core_type<tc>, window_params = [{transform_indices = @transform_0, window_bounds = array<i64: 16, 32>}, {transform_indices = @transform_1, window_bounds = array<i64: 32, 64>}, {transform_indices = @transform_2, window_bounds = array<i64: 1, 64>}, {transform_indices = @transform_3, window_bounds = array<i64: 16, 64>}]} {
    %c0_i32 = arith.constant 0 : i32
    %0 = arith.cmpi eq, %arg2, %c0_i32 : i32
    %1 = arith.extui %0 : i1 to i32
    %c0_i32_0 = arith.constant 0 : i32
    %2 = arith.cmpi ne, %1, %c0_i32_0 : i32
    scf.if %2 {
      %cst_10 = arith.constant 0.000000e+00 : f32
      %12 = vector.broadcast %cst_10 : f32 to vector<16x64xf32>
      %c0_11 = arith.constant 0 : index
      %c0_12 = arith.constant 0 : index
      %13 = vector.load %arg7[%c0_11, %c0_12] : memref<16x64xf32, #tpu.memory_space<vmem>>, vector<16x64xf32>
      tpu.vector_store %arg7[%c0_11, %c0_12], %12 {strides = array<i32>} : memref<16x64xf32, #tpu.memory_space<vmem>>, vector<16x64xf32>,
    } else {
    }
    %c0 = arith.constant 0 : index
    %c0_1 = arith.constant 0 : index
    %3 = vector.load %arg7[%c0, %c0_1] : memref<16x64xf32, #tpu.memory_space<vmem>>, vector<16x64xf32>
    %c0_2 = arith.constant 0 : index
    %c0_3 = arith.constant 0 : index
    %4 = vector.load %arg3[%c0_2, %c0_3] : memref<16x32xbf16, #tpu.memory_space<vmem>>, vector<16x32xbf16>
    %c0_4 = arith.constant 0 : index
    %c0_5 = arith.constant 0 : index
    %5 = vector.load %arg4[%c0_4, %c0_5] : memref<32x64xbf16, #tpu.memory_space<vmem>>, vector<32x64xbf16>
    %cst = arith.constant dense<0.000000e+00> : vector<16x64xf32>
    %6 = tpu.matmul %4, %5, %cst {dimension_numbers = #tpu.dot_dimension_numbers<[1], [0], [0], [1], [0, 0, 1, 1], [], []>} : vector<16x32xbf16>, vector<32x64xbf16>, vector<16x64xf32> -> vector<16x64xf32>
    %7 = arith.addf %3, %6 : vector<16x64xf32>
    %c0_6 = arith.constant 0 : index
    %c0_7 = arith.constant 0 : index
    %8 = vector.load %arg7[%c0_6, %c0_7] : memref<16x64xf32, #tpu.memory_space<vmem>>, vector<16x64xf32>
    tpu.vector_store %arg7[%c0_6, %c0_7], %7 {strides = array<i32>} : memref<16x64xf32, #tpu.memory_space<vmem>>, vector<16x64xf32>,
    %c0_i32_8 = arith.constant 0 : i32
    %9 = arith.cmpi eq, %arg2, %c0_i32_8 : i32
    %10 = arith.extui %9 : i1 to i32
    %c0_i32_9 = arith.constant 0 : i32
    %11 = arith.cmpi ne, %10, %c0_i32_9 : i32
    scf.if %11 {
      %c0_10 = arith.constant 0 : index
      %c0_11 = arith.constant 0 : index
      %12 = vector.load %arg7[%c0_10, %c0_11] : memref<16x64xf32, #tpu.memory_space<vmem>>, vector<16x64xf32>
      %c0_12 = arith.constant 0 : index
      %c0_13 = arith.constant 0 : index
      %13 = vector.load %arg5[%c0_12, %c0_13] : memref<1x64xf32, #tpu.memory_space<vmem>>, vector<1x64xf32>
      %14 = vector.broadcast %13 : vector<1x64xf32> to vector<16x64xf32>
      %15 = arith.addf %12, %14 : vector<16x64xf32>
      %cst_14 = arith.constant 5.000000e-01 : f32
      %16 = vector.broadcast %cst_14 : f32 to vector<16x64xf32>
      %17 = arith.mulf %16, %15 : vector<16x64xf32>
      %cst_15 = arith.constant 0.707106769 : f32
      %18 = vector.broadcast %cst_15 : f32 to vector<16x64xf32>
      %19 = arith.mulf %15, %18 : vector<16x64xf32>
      %20 = math.erf %19 : vector<16x64xf32>
      %cst_16 = arith.constant 1.000000e+00 : f32
      %21 = vector.broadcast %cst_16 : f32 to vector<16x64xf32>
      %22 = arith.addf %21, %20 : vector<16x64xf32>
      %23 = arith.mulf %17, %22 : vector<16x64xf32>
      %24 = arith.truncf %23 : vector<16x64xf32> to vector<16x64xbf16>
      %c0_17 = arith.constant 0 : index
      %c0_18 = arith.constant 0 : index
      %25 = vector.load %arg6[%c0_17, %c0_18] : memref<16x64xbf16, #tpu.memory_space<vmem>>, vector<16x64xbf16>
      tpu.vector_store %arg6[%c0_17, %c0_18], %24 {strides = array<i32>} : memref<16x64xbf16, #tpu.memory_space<vmem>>, vector<16x64xbf16>,
    } else {
    }
    return
  }
  func.func @transform_0(%arg0: i32, %arg1: i32, %arg2: i32) -> (i32, i32) {
    %c0_i32 = arith.constant 0 : i32
    return %arg0, %arg2 : i32, i32
  }
  func.func @transform_1(%arg0: i32, %arg1: i32, %arg2: i32) -> (i32, i32) {
    %c0_i32 = arith.constant 0 : i32
    return %arg2, %arg1 : i32, i32
  }
  func.func @transform_2(%arg0: i32, %arg1: i32, %arg2: i32) -> (i32, i32) {
    %c0_i32 = arith.constant 0 : i32
    %c0_i32_0 = arith.constant 0 : i32
    return %c0_i32, %arg1 : i32, i32
  }
  func.func @transform_3(%arg0: i32, %arg1: i32, %arg2: i32) -> (i32, i32) {
    %c0_i32 = arith.constant 0 : i32
    return %arg0, %arg1 : i32, i32
  }
}

module attributes {stable_mosaic.version = 11 : i64} {
  func.func @_matmul_res_ln_kernel(%arg0: i32, %arg1: i32, %arg2: memref<16x64xbf16, #tpu.memory_space<vmem>>, %arg3: memref<64x32xbf16, #tpu.memory_space<vmem>>, %arg4: memref<1x32xf32, #tpu.memory_space<vmem>>, %arg5: memref<16x32xbf16, #tpu.memory_space<vmem>>, %arg6: memref<1x32xf32, #tpu.memory_space<vmem>>, %arg7: memref<1x32xf32, #tpu.memory_space<vmem>>, %arg8: memref<16x32xbf16, #tpu.memory_space<vmem>>, %arg9: memref<16x32xf32, #tpu.memory_space<vmem>>) attributes {dimension_semantics = [#tpu.dimension_semantics<parallel>, #tpu.dimension_semantics<arbitrary>], iteration_bounds = array<i64: 1, 1>, scalar_prefetch = 0 : i64, scratch_operands = 1 : i64, tpu.core_type = #tpu.core_type<tc>, window_params = [{transform_indices = @transform_0, window_bounds = array<i64: 16, 64>}, {transform_indices = @transform_1, window_bounds = array<i64: 64, 32>}, {pipeline_mode = #tpu.pipeline_mode<synchronous>, transform_indices = @transform_2, window_bounds = array<i64: 1, 32>}, {transform_indices = @transform_3, window_bounds = array<i64: 16, 32>}, {pipeline_mode = #tpu.pipeline_mode<synchronous>, transform_indices = @transform_4, window_bounds = array<i64: 1, 32>}, {pipeline_mode = #tpu.pipeline_mode<synchronous>, transform_indices = @transform_5, window_bounds = array<i64: 1, 32>}, {transform_indices = @transform_6, window_bounds = array<i64: 16, 32>}]} {
    %c0_i32 = arith.constant 0 : i32
    %0 = arith.cmpi eq, %arg1, %c0_i32 : i32
    %1 = arith.extui %0 : i1 to i32
    %c0_i32_0 = arith.constant 0 : i32
    %2 = arith.cmpi ne, %1, %c0_i32_0 : i32
    scf.if %2 {
      %cst_10 = arith.constant 0.000000e+00 : f32
      %12 = vector.broadcast %cst_10 : f32 to vector<16x32xf32>
      %c0_11 = arith.constant 0 : index
      %c0_12 = arith.constant 0 : index
      %13 = vector.load %arg9[%c0_11, %c0_12] : memref<16x32xf32, #tpu.memory_space<vmem>>, vector<16x32xf32>
      tpu.vector_store %arg9[%c0_11, %c0_12], %12 {strides = array<i32>} : memref<16x32xf32, #tpu.memory_space<vmem>>, vector<16x32xf32>,
    } else {
    }
    %c0 = arith.constant 0 : index
    %c0_1 = arith.constant 0 : index
    %3 = vector.load %arg9[%c0, %c0_1] : memref<16x32xf32, #tpu.memory_space<vmem>>, vector<16x32xf32>
    %c0_2 = arith.constant 0 : index
    %c0_3 = arith.constant 0 : index
    %4 = vector.load %arg2[%c0_2, %c0_3] : memref<16x64xbf16, #tpu.memory_space<vmem>>, vector<16x64xbf16>
    %c0_4 = arith.constant 0 : index
    %c0_5 = arith.constant 0 : index
    %5 = vector.load %arg3[%c0_4, %c0_5] : memref<64x32xbf16, #tpu.memory_space<vmem>>, vector<64x32xbf16>
    %cst = arith.constant dense<0.000000e+00> : vector<16x32xf32>
    %6 = tpu.matmul %4, %5, %cst {dimension_numbers = #tpu.dot_dimension_numbers<[1], [0], [0], [1], [0, 0, 1, 1], [], []>} : vector<16x64xbf16>, vector<64x32xbf16>, vector<16x32xf32> -> vector<16x32xf32>
    %7 = arith.addf %3, %6 : vector<16x32xf32>
    %c0_6 = arith.constant 0 : index
    %c0_7 = arith.constant 0 : index
    %8 = vector.load %arg9[%c0_6, %c0_7] : memref<16x32xf32, #tpu.memory_space<vmem>>, vector<16x32xf32>
    tpu.vector_store %arg9[%c0_6, %c0_7], %7 {strides = array<i32>} : memref<16x32xf32, #tpu.memory_space<vmem>>, vector<16x32xf32>,
    %c0_i32_8 = arith.constant 0 : i32
    %9 = arith.cmpi eq, %arg1, %c0_i32_8 : i32
    %10 = arith.extui %9 : i1 to i32
    %c0_i32_9 = arith.constant 0 : i32
    %11 = arith.cmpi ne, %10, %c0_i32_9 : i32
    scf.if %11 {
      %c0_10 = arith.constant 0 : index
      %c0_11 = arith.constant 0 : index
      %12 = vector.load %arg9[%c0_10, %c0_11] : memref<16x32xf32, #tpu.memory_space<vmem>>, vector<16x32xf32>
      %c0_12 = arith.constant 0 : index
      %c0_13 = arith.constant 0 : index
      %13 = vector.load %arg4[%c0_12, %c0_13] : memref<1x32xf32, #tpu.memory_space<vmem>>, vector<1x32xf32>
      %14 = vector.broadcast %13 : vector<1x32xf32> to vector<16x32xf32>
      %15 = arith.addf %12, %14 : vector<16x32xf32>
      %c0_14 = arith.constant 0 : index
      %c0_15 = arith.constant 0 : index
      %16 = vector.load %arg5[%c0_14, %c0_15] : memref<16x32xbf16, #tpu.memory_space<vmem>>, vector<16x32xbf16>
      %17 = arith.extf %16 : vector<16x32xbf16> to vector<16x32xf32>
      %18 = arith.addf %15, %17 : vector<16x32xf32>
      %cst_16 = arith.constant dense<0.000000e+00> : vector<16xf32>
      %19 = vector.multi_reduction <add>, %18, %cst_16 [1] : vector<16x32xf32> to vector<16xf32>
      %20 = vector.shape_cast %19 : vector<16xf32> to vector<16x1xf32>
      %cst_17 = arith.constant 3.200000e+01 : f32
      %21 = vector.broadcast %cst_17 : f32 to vector<16x1xf32>
      %22 = arith.divf %20, %21 : vector<16x1xf32>
      %23 = vector.broadcast %22 : vector<16x1xf32> to vector<16x32xf32>
      %24 = arith.subf %18, %23 : vector<16x32xf32>
      %25 = arith.mulf %24, %24 : vector<16x32xf32>
      %cst_18 = arith.constant dense<0.000000e+00> : vector<16xf32>
      %26 = vector.multi_reduction <add>, %25, %cst_18 [1] : vector<16x32xf32> to vector<16xf32>
      %27 = vector.shape_cast %26 : vector<16xf32> to vector<16x1xf32>
      %cst_19 = arith.constant 3.200000e+01 : f32
      %28 = vector.broadcast %cst_19 : f32 to vector<16x1xf32>
      %29 = arith.divf %27, %28 : vector<16x1xf32>
      %cst_20 = arith.constant 9.99999996E-13 : f32
      %30 = vector.broadcast %cst_20 : f32 to vector<16x1xf32>
      %31 = arith.addf %29, %30 : vector<16x1xf32>
      %32 = math.rsqrt %31 : vector<16x1xf32>
      %33 = vector.broadcast %22 : vector<16x1xf32> to vector<16x32xf32>
      %34 = arith.subf %18, %33 : vector<16x32xf32>
      %35 = vector.broadcast %32 : vector<16x1xf32> to vector<16x32xf32>
      %36 = arith.mulf %34, %35 : vector<16x32xf32>
      %c0_21 = arith.constant 0 : index
      %c0_22 = arith.constant 0 : index
      %37 = vector.load %arg6[%c0_21, %c0_22] : memref<1x32xf32, #tpu.memory_space<vmem>>, vector<1x32xf32>
      %38 = vector.broadcast %37 : vector<1x32xf32> to vector<16x32xf32>
      %39 = arith.mulf %36, %38 : vector<16x32xf32>
      %c0_23 = arith.constant 0 : index
      %c0_24 = arith.constant 0 : index
      %40 = vector.load %arg7[%c0_23, %c0_24] : memref<1x32xf32, #tpu.memory_space<vmem>>, vector<1x32xf32>
      %41 = vector.broadcast %40 : vector<1x32xf32> to vector<16x32xf32>
      %42 = arith.addf %39, %41 : vector<16x32xf32>
      %43 = arith.truncf %42 : vector<16x32xf32> to vector<16x32xbf16>
      %c0_25 = arith.constant 0 : index
      %c0_26 = arith.constant 0 : index
      %44 = vector.load %arg8[%c0_25, %c0_26] : memref<16x32xbf16, #tpu.memory_space<vmem>>, vector<16x32xbf16>
      tpu.vector_store %arg8[%c0_25, %c0_26], %43 {strides = array<i32>} : memref<16x32xbf16, #tpu.memory_space<vmem>>, vector<16x32xbf16>,
    } else {
    }
    return
  }
  func.func @transform_0(%arg0: i32, %arg1: i32) -> (i32, i32) {
    %c0_i32 = arith.constant 0 : i32
    return %arg0, %arg1 : i32, i32
  }
  func.func @transform_1(%arg0: i32, %arg1: i32) -> (i32, i32) {
    %c0_i32 = arith.constant 0 : i32
    %c0_i32_0 = arith.constant 0 : i32
    return %arg1, %c0_i32 : i32, i32
  }
  func.func @transform_2(%arg0: i32, %arg1: i32) -> (i32, i32) {
    %c0_i32 = arith.constant 0 : i32
    %c0_i32_0 = arith.constant 0 : i32
    %c0_i32_1 = arith.constant 0 : i32
    return %c0_i32, %c0_i32_0 : i32, i32
  }
  func.func @transform_3(%arg0: i32, %arg1: i32) -> (i32, i32) {
    %c0_i32 = arith.constant 0 : i32
    %c0_i32_0 = arith.constant 0 : i32
    return %arg0, %c0_i32 : i32, i32
  }
  func.func @transform_4(%arg0: i32, %arg1: i32) -> (i32, i32) {
    %c0_i32 = arith.constant 0 : i32
    %c0_i32_0 = arith.constant 0 : i32
    %c0_i32_1 = arith.constant 0 : i32
    return %c0_i32, %c0_i32_0 : i32, i32
  }
  func.func @transform_5(%arg0: i32, %arg1: i32) -> (i32, i32) {
    %c0_i32 = arith.constant 0 : i32
    %c0_i32_0 = arith.constant 0 : i32
    %c0_i32_1 = arith.constant 0 : i32
    return %c0_i32, %c0_i32_0 : i32, i32
  }
  func.func @transform_6(%arg0: i32, %arg1: i32) -> (i32, i32) {
    %c0_i32 = arith.constant 0 : i32
    %c0_i32_0 = arith.constant 0 : i32
    return %arg0, %c0_i32 : i32, i32
  }
}

</mosaic_0001>

<llo_original>
// kernel: text_encoder_forward.12
$region0: #{text_encoder_forward.12}
  #allocation0 [shape = 'u32[]', space=smem, size = 0x4, offset = 0x4, fixed_abs, tag = 'smem constant byte address 0x4 - core index']
  #allocation1 [shape = 'u32[144,128]{1,0:T(1,128)}', space=vmem, size = 0x12000, scoped, tag = 'internal scratch']
  #allocation2 [shape = 'f32[16,96]{1,0:T(8,128)}', space=vmem, size = 0x2000, scoped, tag = 'scratch operand']
  %s0 = inlined_call_operand.vmem [shape: bf16[16,32], index: 0, kind: input, shape index: {}]
  %s1 = inlined_call_operand.vmem [shape: bf16[32,96], index: 1, kind: input, shape index: {}]
  %s2 = inlined_call_operand.vmem [shape: f32[1,96], index: 2, kind: input, shape index: {}]
  %s3 = inlined_call_operand.vmem [shape: bf16[16,96], index: 3, kind: output, shape index: {}]
  %s4 = sld [smem:[#allocation0]]
  $region30: #{text_encoder_forward.12} parent=0
    _
  %s6 = ssub.s32 1, %s4
  %s7 = scalar_select 0, %s6, %s4
  // Predicated region
  $region2: #{text_encoder_forward.12} parent=0 // pred_check
    _
  $region3: #{text_encoder_forward.12} parent=0 // pred_check_branch
    %9 = sbr.rel (0) target = $region5
  $region4: #{text_encoder_forward.12} parent=0 // pred_region
    _
  $region5: #{text_encoder_forward.12} parent=0 // pred_fallthru
    _
  // Predicated region
  $region6: #{text_encoder_forward.12} parent=0 // pred_check
    _
  $region7: #{text_encoder_forward.12} parent=0 // pred_check_branch
    %11 = sbr.rel (0) target = $region9
  $region8: #{text_encoder_forward.12} parent=0 // pred_region
    _
  $region9: #{text_encoder_forward.12} parent=0 // pred_fallthru
    _
  // Predicated region
  $region10: #{text_encoder_forward.12} parent=0 // pred_check
    _
  $region11: #{text_encoder_forward.12} parent=0 // pred_check_branch
    %13 = sbr.rel (0) target = $region13
  $region12: #{text_encoder_forward.12} parent=0 // pred_region
    _
  $region13: #{text_encoder_forward.12} parent=0 // pred_fallthru
    _
  %p15 = scmp.eq.s32.totalorder 0, 0
  // Predicated region
  $region14: #{text_encoder_forward.12} parent=0 // pred_check
    %p16 = pneg %p15
  $region15: #{text_encoder_forward.12} parent=0 // pred_check_branch
    %18 = sbr.rel (%p16) target = $region17
  $region16: #{text_encoder_forward.12} parent=0 // pred_region
    %vm19 = vcmask 785408
    %20 = vst.msk [vmem:[#allocation2] sm:$0xff] %vm19, 0.0
    %21 = vst.msk [vmem:[#allocation2 + $0x8] sm:$0xff] %vm19, 0.0
  $region17: #{text_encoder_forward.12} parent=0 // pred_fallthru
    _
  %v22 = vld [vmem:[#allocation2] sm:$0xff]
  %v23 = vld [vmem:[#allocation2 + $0x8] sm:$0xff]
  %v24 = vld [vmem:[%s0] sm:$0xf]
  %v25 = vld [vmem:[%s0 + $0x4] sm:$0xf]
  %v26 = vld [vmem:[%s1] sm:$0xf]
  %v27 = vld [vmem:[%s1 + $0x4] sm:$0xf]
  %v28 = vld [vmem:[%s1 + $0x8] sm:$0xf]
  %v29 = vld [vmem:[%s1 + $0xc] sm:$0xf]
  %v32 = vunpack.c.l.b16 %v24
  %v33 = vunpack.c.l.b16 %v25
  %v34 = vpack.c.b16 %v33, %v32
  %v39 = vunpack.c.l.b16 %v26
  %v40 = vunpack.c.l.b16 %v27
  %v41 = vunpack.c.l.b16 %v28
  %v42 = vunpack.c.l.b16 %v29
  %v43 = vpack.c.b16 %v40, %v39
  %v44 = vpack.c.b16 %v42, %v41
  %vm47 = vcmask 261120
  %v49 = vsel %vm47, %v34, 0
  %51 = vmatprep.subr.bf16.mxu0 0
  %52 = vmatpush1.bf16.msra.mxu0 %v43
  %53 = vmatprep.subr.bf16.mxu0 0
  %54 = vmatpush1.bf16.msra.mxu0 %v44
  %55 = vmatprep.subr.bf16.mxu0 0
  %56 = vmatpush1.bf16.msra.mxu0 0
  %57 = vmatprep.subr.bf16.mxu0 0
  %58 = vmatpush1.bf16.msra.mxu0 0
  %59 = vmatprep.subr.bf16.mxu0 0
  %60 = vmatpush1.bf16.msra.mxu0 0
  %61 = vmatprep.subr.bf16.mxu0 0
  %62 = vmatpush1.bf16.msra.mxu0 0
  %63 = vmatprep.subr.bf16.mxu0 0
  %64 = vmatpush1.bf16.msra.mxu0 0
  %65 = vmatprep.subr.bf16.mxu0 0
  %66 = vmatpush1.bf16.msra.mxu0 0
  %67 = vmatprep.subr.bf16.mxu0 0
  %68 = vmatpush1.bf16.msra.mxu0 0
  %69 = vmatprep.subr.bf16.mxu0 0
  %70 = vmatpush1.bf16.msra.mxu0 0
  %71 = vmatprep.subr.bf16.mxu0 0
  %72 = vmatpush1.bf16.msra.mxu0 0
  %73 = vmatprep.subr.bf16.mxu0 0
  %74 = vmatpush1.bf16.msra.mxu0 0
  %75 = vmatprep.subr.bf16.mxu0 0
  %76 = vmatpush1.bf16.msra.mxu0 0
  %77 = vmatprep.subr.bf16.mxu0 0
  %78 = vmatpush1.bf16.msra.mxu0 0
  %79 = vmatprep.subr.bf16.mxu0 0
  %80 = vmatpush1.bf16.msra.mxu0 0
  %81 = vmatprep.subr.bf16.mxu0 0
  %82 = vmatpush1.bf16.msra.mxu0 0
  %83 = vmatprep.mubr.bf16.mxu0 0
  %84 = vmatmul.mubr.bf16.gmra.mrb[0].mxu0 %v49
  %v85 = vpop.f32.mrb[0].mxu0
  %v86 = vadd.f32 0.0, %v85
  %v87 = vpop.f32.mrb[0].mxu0
  %v88 = vpop.f32.mrb[0].mxu0
  %v89 = vadd.f32 0.0, %v88
  %v90 = vpop.f32.mrb[0].mxu0
  %91 = vdwg.mxu0
  %v92 = vadd.f32 %v22, %v86
  %v93 = vadd.f32 %v23, %v89
  %vm94 = vcmask 785408
  %95 = vst.msk [vmem:[#allocation2] sm:$0xff] %vm94, %v92
  %96 = vst.msk [vmem:[#allocation2 + $0x8] sm:$0xff] %vm94, %v93
  // Predicated region
  $region18: #{text_encoder_forward.12} parent=0 // pred_check
    %p97 = pneg %p15
  $region19: #{text_encoder_forward.12} parent=0 // pred_check_branch
    %99 = sbr.rel (%p97) target = $region21
  $region20: #{text_encoder_forward.12} parent=0 // pred_region
    %v100 = vld [vmem:[#allocation2] sm:$0xff]
    %v101 = vld [vmem:[#allocation2 + $0x8] sm:$0xff]
    %v102 = vld [vmem:[%s2] sm:$0x1]
    %v104 = vlaneseq
    %v105 = vshrl.u32 %v104, 7
    %v106 = vsub.s32 0, %v105
    %v107 = vrot.slane %v102, %v106
    %v109 = vadd.f32 %v100, %v107
    %v110 = vadd.f32 %v101, %v107
    %v111 = vpack.c.bf16 %v110, %v109
    %v113 = vunpack.c.l.b16 %v111
    %v114 = vunpack.c.h.b16 %v111
    %v115 = vpack.c.b16 %v113, %v113
    %v116 = vpack.c.b16 %v114, %v114
    %vm119 = vcmask 781312
    %120 = vst.msk [vmem:[%s3] sm:$0xf] %vm119, %v115
    %121 = vst.msk [vmem:[%s3 + $0x4] sm:$0xf] %vm119, %v116
  $region21: #{text_encoder_forward.12} parent=0 // pred_fallthru
    _
  // Predicated region
  $region22: #{text_encoder_forward.12} parent=0 // pred_check
    _
  $region23: #{text_encoder_forward.12} parent=0 // pred_check_branch
    %123 = sbr.rel (0) target = $region25
  $region24: #{text_encoder_forward.12} parent=0 // pred_region
    _
  $region25: #{text_encoder_forward.12} parent=0 // pred_fallthru
    _
  // Predicated region
  $region26: #{text_encoder_forward.12} parent=0 // pred_check
    _
  $region27: #{text_encoder_forward.12} parent=0 // pred_check_branch
    %125 = sbr.rel (0) target = $region29
  $region28: #{text_encoder_forward.12} parent=0 // pred_region
    _
  $region29: #{text_encoder_forward.12} parent=0 // pred_fallthru
    _

// kernel: text_encoder_forward.11
$region0: #{text_encoder_forward.11}
  #allocation0 [shape = 'u32[]', space=smem, size = 0x4, offset = 0x4, fixed_abs, tag = 'smem constant byte address 0x4 - core index']
  #allocation1 [shape = 'u32[144,128]{1,0:T(1,128)}', space=vmem, size = 0x12000, scoped, tag = 'internal scratch']
  %s0 = inlined_call_operand.vmem [shape: f32[16,32], index: 0, kind: input, shape index: {}]
  %s1 = inlined_call_operand.vmem [shape: f32[1,32], index: 1, kind: input, shape index: {}]
  %s2 = inlined_call_operand.vmem [shape: f32[1,32], index: 2, kind: input, shape index: {}]
  %s3 = inlined_call_operand.vmem [shape: bf16[16,32], index: 3, kind: output, shape index: {}]
  %s4 = sld [smem:[#allocation0]]
  $region22: #{text_encoder_forward.11} parent=0
    _
  %s6 = ssub.s32 1, %s4
  %s7 = scalar_select 0, %s6, %s4
  // Predicated region
  $region2: #{text_encoder_forward.11} parent=0 // pred_check
    _
  $region3: #{text_encoder_forward.11} parent=0 // pred_check_branch
    %9 = sbr.rel (0) target = $region5
  $region4: #{text_encoder_forward.11} parent=0 // pred_region
    _
  $region5: #{text_encoder_forward.11} parent=0 // pred_fallthru
    _
  // Predicated region
  $region6: #{text_encoder_forward.11} parent=0 // pred_check
    _
  $region7: #{text_encoder_forward.11} parent=0 // pred_check_branch
    %11 = sbr.rel (0) target = $region9
  $region8: #{text_encoder_forward.11} parent=0 // pred_region
    _
  $region9: #{text_encoder_forward.11} parent=0 // pred_fallthru
    _
  // Predicated region
  $region10: #{text_encoder_forward.11} parent=0 // pred_check
    _
  $region11: #{text_encoder_forward.11} parent=0 // pred_check_branch
    %13 = sbr.rel (0) target = $region13
  $region12: #{text_encoder_forward.11} parent=0 // pred_region
    _
  $region13: #{text_encoder_forward.11} parent=0 // pred_fallthru
    _
  %v14 = vld [vmem:[%s0] sm:$0xff]
  %v15 = vld [vmem:[%s0 + $0x8] sm:$0xff]
  %vm16 = vcmask 261120
  %v17 = vsel %vm16, %v14, 0.0
  %18 = vadd.xlane.f32.xlu0 %v17
  %v19 = vpop.xlane.xlu0 %18
  %v20 = vsel %vm16, %v15, 0.0
  %21 = vadd.xlane.f32.xlu0 %v20
  %v22 = vpop.xlane.xlu0 %21
  %v23 = vrcp.pop 32.0
  %v24 = vmul.f32 %v19, %v23
  %v25 = vmul.f32 %v22, %v23
  %v26 = vsub.f32 %v14, %v24
  %v27 = vsub.f32 %v15, %v25
  %v28 = vmul.f32 %v26, %v26
  %v29 = vmul.f32 %v27, %v27
  %v30 = vsel %vm16, %v28, 0.0
  %31 = vadd.xlane.f32.xlu0 %v30
  %v32 = vpop.xlane.xlu0 %31
  %v33 = vsel %vm16, %v29, 0.0
  %34 = vadd.xlane.f32.xlu0 %v33
  %v35 = vpop.xlane.xlu0 %34
  %v36 = vmul.f32 %v32, %v23
  %v37 = vmul.f32 %v35, %v23
  %v38 = vadd.f32 %v36, 1e-12
  %v39 = vadd.f32 %v37, 1e-12
  %v40 = vrsqrt.pop %v38
  %v41 = vrsqrt.pop %v39
  %v42 = vmul.f32 %v26, %v40
  %v43 = vmul.f32 %v27, %v41
  %v44 = vld [vmem:[%s1] sm:$0x1]
  %v46 = vlaneseq
  %v47 = vshrl.u32 %v46, 7
  %v48 = vsub.s32 0, %v47
  %v49 = vrot.slane %v44, %v48
  %v51 = vmul.f32 %v42, %v49
  %v52 = vmul.f32 %v43, %v49
  %v53 = vld [vmem:[%s2] sm:$0x1]
  %v55 = vlaneseq
  %v56 = vshrl.u32 %v55, 7
  %v57 = vsub.s32 0, %v56
  %v58 = vrot.slane %v53, %v57
  %v60 = vadd.f32 %v51, %v58
  %v61 = vadd.f32 %v52, %v58
  %v62 = vpack.c.bf16 %v61, %v60
  %v64 = vunpack.c.l.b16 %v62
  %v65 = vunpack.c.h.b16 %v62
  %v66 = vpack.c.b16 %v64, %v64
  %v67 = vpack.c.b16 %v65, %v65
  %vm70 = vcmask 257024
  %71 = vst.msk [vmem:[%s3] sm:$0xf] %vm70, %v66
  %72 = vst.msk [vmem:[%s3 + $0x4] sm:$0xf] %vm70, %v67
  // Predicated region
  $region14: #{text_encoder_forward.11} parent=0 // pred_check
    _
  $region15: #{text_encoder_forward.11} parent=0 // pred_check_branch
    %74 = sbr.rel (0) target = $region17
  $region16: #{text_encoder_forward.11} parent=0 // pred_region
    _
  $region17: #{text_encoder_forward.11} parent=0 // pred_fallthru
    _
  // Predicated region
  $region18: #{text_encoder_forward.11} parent=0 // pred_check
    _
  $region19: #{text_encoder_forward.11} parent=0 // pred_check_branch
    %76 = sbr.rel (0) target = $region21
  $region20: #{text_encoder_forward.11} parent=0 // pred_region
    _
  $region21: #{text_encoder_forward.11} parent=0 // pred_fallthru
    _

// kernel: text_encoder_forward.13
$region0: #{text_encoder_forward.13}
  #allocation0 [shape = 'u32[]', space=smem, size = 0x4, offset = 0x4, fixed_abs, tag = 'smem constant byte address 0x4 - core index']
  #allocation1 [shape = 'u32[144,128]{1,0:T(1,128)}', space=vmem, size = 0x12000, scoped, tag = 'internal scratch']
  %s0 = inlined_call_operand.vmem [shape: bf16[2,4,8,8], index: 0, kind: input, shape index: {}]
  %s1 = inlined_call_operand.vmem [shape: bf16[2,4,8,8], index: 1, kind: input, shape index: {}]
  %s2 = inlined_call_operand.vmem [shape: bf16[2,4,8,8], index: 2, kind: input, shape index: {}]
  %s3 = inlined_call_operand.vmem [shape: f32[2,1,8], index: 3, kind: input, shape index: {}]
  %s4 = inlined_call_operand.vmem [shape: bf16[2,4,8,8], index: 4, kind: output, shape index: {}]
  %s5 = sld [smem:[#allocation0]]
  $region49: #{text_encoder_forward.13} parent=0
    _
  %s7 = ssub.s32 1, %s5
  %s8 = scalar_select 0, %s7, %s5
  loop: start=0, step=1, limit=4
  $region2: #{text_encoder_forward.13} parent=0 // loop_pre_header
    _
  $region3: #{text_encoder_forward.13} parent=0 // loop_header
    %s10 = sphi 0, %s14
    %p11 = scmp.ge.s32.totalorder %s10, 4
    %s20 = sphi 0, %s22
    %s23 = sphi 0, %s20
    %s24 = sphi 0, %s23
    %s40 = sphi 0, %s24
    %s46 = sphi 0, %s48
    %s49 = sphi 0, %s46
    %s50 = sphi 0, %s49
    %s66 = sphi 0, %s50
    %s72 = sphi 0, %s74
    %s75 = sphi 0, %s72
    %s76 = sphi 0, %s75
    %s92 = sphi 0, %s76
    %s98 = sphi 0, %s100
    %s101 = sphi 0, %s98
    %s102 = sphi 0, %s101
    %s118 = sphi 0, %s102
    %s124 = sphi 0, %s126
    %s127 = sphi 0, %s124
    %s128 = sphi 0, %s127
    %s144 = sphi 0, %s128
  $region4: #{text_encoder_forward.13} parent=0 // loop_header_branch
    %13 = sbr.rel (%p11) target = $region8
  $region5: #{text_encoder_forward.13} parent=0 // loop_body
    %s15 = ssub.s32 %s10, 1
    %s16 = ssub.s32 %s10, 2
    %s17 = sadd.s32 %s10, 1
    %s18 = ssub.s32 %s10, %s17
    %p19 = scmp.eq.s32.totalorder %s18, 0
    %s21 = sadd.s32 %s20, 1
    %s22 = scalar_select %p19, %s20, %s21
    %p25 = pneg %p19
    %p26 = scmp.eq.s32.totalorder %s10, 1
    %p27 = por %p25, %p26
    %p28 = scmp.ne.s32.totalorder %s20, %s23
    %p29 = scmp.eq.s32.totalorder %s10, 0
    %p30 = por %p28, %p29
    %p31 = scmp.ne.s32.totalorder %s20, %s23
    %p32 = scmp.eq.s32.totalorder %s15, 1
    %p33 = por %p31, %p32
    %p34 = scmp.ne.s32.totalorder %s23, %s24
    %p35 = scmp.eq.s32.totalorder %s15, 0
    %p36 = por %p34, %p35
    %p37 = scmp.ne.s32.totalorder %s23, %s24
    %p38 = scmp.eq.s32.totalorder %s16, 1
    %p39 = por %p37, %p38
    %p41 = scmp.ne.s32.totalorder %s24, %s40
    %p42 = scmp.eq.s32.totalorder %s16, 0
    %p43 = por %p41, %p42
    %s44 = ssub.s32 %s10, %s17
    %p45 = scmp.eq.s32.totalorder %s44, 0
    %s47 = sadd.s32 %s46, 1
    %s48 = scalar_select %p45, %s46, %s47
    %p51 = pneg %p45
    %p52 = scmp.eq.s32.totalorder %s10, 1
    %p53 = por %p51, %p52
    %p54 = scmp.ne.s32.totalorder %s46, %s49
    %p55 = scmp.eq.s32.totalorder %s10, 0
    %p56 = por %p54, %p55
    %p57 = scmp.ne.s32.totalorder %s46, %s49
    %p58 = scmp.eq.s32.totalorder %s15, 1
    %p59 = por %p57, %p58
    %p60 = scmp.ne.s32.totalorder %s49, %s50
    %p61 = scmp.eq.s32.totalorder %s15, 0
    %p62 = por %p60, %p61
    %p63 = scmp.ne.s32.totalorder %s49, %s50
    %p64 = scmp.eq.s32.totalorder %s16, 1
    %p65 = por %p63, %p64
    %p67 = scmp.ne.s32.totalorder %s50, %s66
    %p68 = scmp.eq.s32.totalorder %s16, 0
    %p69 = por %p67, %p68
    %s70 = ssub.s32 %s10, %s17
    %p71 = scmp.eq.s32.totalorder %s70, 0
    %s73 = sadd.s32 %s72, 1
    %s74 = scalar_select %p71, %s72, %s73
    %p77 = pneg %p71
    %p78 = scmp.eq.s32.totalorder %s10, 1
    %p79 = por %p77, %p78
    %p80 = scmp.ne.s32.totalorder %s72, %s75
    %p81 = scmp.eq.s32.totalorder %s10, 0
    %p82 = por %p80, %p81
    %p83 = scmp.ne.s32.totalorder %s72, %s75
    %p84 = scmp.eq.s32.totalorder %s15, 1
    %p85 = por %p83, %p84
    %p86 = scmp.ne.s32.totalorder %s75, %s76
    %p87 = scmp.eq.s32.totalorder %s15, 0
    %p88 = por %p86, %p87
    %p89 = scmp.ne.s32.totalorder %s75, %s76
    %p90 = scmp.eq.s32.totalorder %s16, 1
    %p91 = por %p89, %p90
    %p93 = scmp.ne.s32.totalorder %s76, %s92
    %p94 = scmp.eq.s32.totalorder %s16, 0
    %p95 = por %p93, %p94
    %s96 = ssub.s32 %s10, %s17
    %p97 = scmp.eq.s32.totalorder %s96, 0
    %s99 = sadd.s32 %s98, 1
    %s100 = scalar_select %p97, %s98, %s99
    %p103 = pneg %p97
    %p104 = scmp.eq.s32.totalorder %s10, 1
    %p105 = por %p103, %p104
    %p106 = scmp.ne.s32.totalorder %s98, %s101
    %p107 = scmp.eq.s32.totalorder %s10, 0
    %p108 = por %p106, %p107
    %p109 = scmp.ne.s32.totalorder %s98, %s101
    %p110 = scmp.eq.s32.totalorder %s15, 1
    %p111 = por %p109, %p110
    %p112 = scmp.ne.s32.totalorder %s101, %s102
    %p113 = scmp.eq.s32.totalorder %s15, 0
    %p114 = por %p112, %p113
    %p115 = scmp.ne.s32.totalorder %s101, %s102
    %p116 = scmp.eq.s32.totalorder %s16, 1
    %p117 = por %p115, %p116
    %p119 = scmp.ne.s32.totalorder %s102, %s118
    %p120 = scmp.eq.s32.totalorder %s16, 0
    %p121 = por %p119, %p120
    %s122 = ssub.s32 %s10, %s17
    %p123 = scmp.eq.s32.totalorder %s122, 0
    %s125 = sadd.s32 %s124, 1
    %s126 = scalar_select %p123, %s124, %s125
    %p129 = pneg %p123
    %p130 = scmp.eq.s32.totalorder %s10, 1
    %p131 = por %p129, %p130
    %p132 = scmp.ne.s32.totalorder %s124, %s127
    %p133 = scmp.eq.s32.totalorder %s10, 0
    %p134 = por %p132, %p133
    %p135 = scmp.ne.s32.totalorder %s124, %s127
    %p136 = scmp.eq.s32.totalorder %s15, 1
    %p137 = por %p135, %p136
    %p138 = scmp.ne.s32.totalorder %s127, %s128
    %p139 = scmp.eq.s32.totalorder %s15, 0
    %p140 = por %p138, %p139
    %p141 = scmp.ne.s32.totalorder %s127, %s128
    %p142 = scmp.eq.s32.totalorder %s16, 1
    %p143 = por %p141, %p142
    %p145 = scmp.ne.s32.totalorder %s128, %s144
    %p146 = scmp.eq.s32.totalorder %s16, 0
    %p147 = por %p145, %p146
    %p148 = scmp.le.s32.totalorder 1, %s10
    %p149 = scmp.lt.s32.totalorder %s10, 3
    %p150 = pnand %p148, %p149
    %p151 = pneg %p150
    // Predicated region
    $region9: #{text_encoder_forward.13} parent=5 // pred_check
      _
    $region10: #{text_encoder_forward.13} parent=5 // pred_check_branch
      %153 = sbr.rel (%p150) target = $region12
    $region11: #{text_encoder_forward.13} parent=5 // pred_region
      %s154 = ssub.s32 %s10, 1
    $region12: #{text_encoder_forward.13} parent=5 // pred_fallthru
      _
    %p155 = scmp.lt.s32.totalorder %s10, 2
    // Predicated region
    $region13: #{text_encoder_forward.13} parent=5 // pred_check
      %p156 = pneg %p155
    $region14: #{text_encoder_forward.13} parent=5 // pred_check_branch
      %158 = sbr.rel (%p156) target = $region16
    $region15: #{text_encoder_forward.13} parent=5 // pred_region
      // Predicated region
      $region17: #{text_encoder_forward.13} parent=15 // pred_check
        %p159 = pneg %p30
      $region18: #{text_encoder_forward.13} parent=15 // pred_check_branch
        %161 = sbr.rel (%p159) target = $region20
      $region19: #{text_encoder_forward.13} parent=15 // pred_region
        %p162 = scmp.lt.s32.totalorder %s10, 1
        %s163 = scalar_select %p162, %s10, 1
        %s164 = smul.addr %s163, 4
        %s165 = smul.addr %s164, 4
        %s166 = scalar_lea.vmem %s0, %s165
      $region20: #{text_encoder_forward.13} parent=15 // pred_fallthru
        _
      // Predicated region
      $region21: #{text_encoder_forward.13} parent=15 // pred_check
        %p167 = pneg %p56
      $region22: #{text_encoder_forward.13} parent=15 // pred_check_branch
        %169 = sbr.rel (%p167) target = $region24
      $region23: #{text_encoder_forward.13} parent=15 // pred_region
        %p170 = scmp.lt.s32.totalorder %s10, 1
        %s171 = scalar_select %p170, %s10, 1
        %s172 = smul.addr %s171, 4
        %s173 = smul.addr %s172, 4
        %s174 = scalar_lea.vmem %s1, %s173
      $region24: #{text_encoder_forward.13} parent=15 // pred_fallthru
        _
      // Predicated region
      $region25: #{text_encoder_forward.13} parent=15 // pred_check
        %p175 = pneg %p82
      $region26: #{text_encoder_forward.13} parent=15 // pred_check_branch
        %177 = sbr.rel (%p175) target = $region28
      $region27: #{text_encoder_forward.13} parent=15 // pred_region
        %p178 = scmp.lt.s32.totalorder %s10, 1
        %s179 = scalar_select %p178, %s10, 1
        %s180 = smul.addr %s179, 4
        %s181 = smul.addr %s180, 4
        %s182 = scalar_lea.vmem %s2, %s181
      $region28: #{text_encoder_forward.13} parent=15 // pred_fallthru
        _
      // Predicated region
      $region29: #{text_encoder_forward.13} parent=15 // pred_check
        %p183 = pneg %p108
      $region30: #{text_encoder_forward.13} parent=15 // pred_check_branch
        %185 = sbr.rel (%p183) target = $region32
      $region31: #{text_encoder_forward.13} parent=15 // pred_region
        %p186 = scmp.lt.s32.totalorder %s10, 1
        %s187 = scalar_select %p186, %s10, 1
        %s188 = scalar_lea.vmem %s3, %s187
      $region32: #{text_encoder_forward.13} parent=15 // pred_fallthru
        _
    $region16: #{text_encoder_forward.13} parent=5 // pred_fallthru
      _
    %p189 = scmp.le.s32.totalorder 1, %s10
    %p190 = scmp.lt.s32.totalorder %s10, 3
    %p191 = pnand %p189, %p190
    %p192 = pneg %p191
    // Predicated region
    $region33: #{text_encoder_forward.13} parent=5 // pred_check
      _
    $region34: #{text_encoder_forward.13} parent=5 // pred_check_branch
      %194 = sbr.rel (%p191) target = $region36
    $region35: #{text_encoder_forward.13} parent=5 // pred_region
      %s195 = ssub.s32 %s10, 1
      %p196 = scmp.lt.s32.totalorder %s15, 1
      %s197 = scalar_select %p196, %s15, 1
      %s198 = smul.addr %s197, 4
      %s199 = smul.addr %s198, 4
      %s200 = scalar_lea.vmem %s0, %s199
      %p201 = pneg %p36
      %p202 = pneg %p33
      %p203 = scmp.lt.s32.totalorder %s15, 1
      %s204 = scalar_select %p203, %s15, 1
      %s205 = smul.addr %s204, 4
      %s206 = smul.addr %s205, 4
      %s207 = scalar_lea.vmem %s1, %s206
      %p208 = pneg %p62
      %p209 = pneg %p59
      %p210 = scmp.lt.s32.totalorder %s15, 1
      %s211 = scalar_select %p210, %s15, 1
      %s212 = smul.addr %s211, 4
      %s213 = smul.addr %s212, 4
      %s214 = scalar_lea.vmem %s2, %s213
      %p215 = pneg %p88
      %p216 = pneg %p85
      %p217 = scmp.lt.s32.totalorder %s15, 1
      %s218 = scalar_select %p217, %s15, 1
      %s219 = scalar_lea.vmem %s3, %s218
      %p220 = pneg %p114
      %p221 = pneg %p111
      %p222 = pneg %p140
      %p223 = pneg %p137
      %p224 = scmp.lt.s32.totalorder %s15, 1
      %s225 = scalar_select %p224, %s15, 1
      %s226 = smul.addr %s225, 4
      %s227 = smul.addr %s226, 4
      %s228 = scalar_lea.vmem %s4, %s227
      %p229 = scmp.lt.s32.totalorder %s15, 1
      %s230 = scalar_select %p229, %s15, 1
      %s231 = smul.addr %s230, 4
      %s232 = smul.addr %s231, 4
      %s233 = scalar_lea.vmem %s0, %s232
      %p234 = scmp.lt.s32.totalorder %s15, 1
      %s235 = scalar_select %p234, %s15, 1
      %s236 = smul.addr %s235, 4
      %s237 = smul.addr %s236, 4
      %s238 = scalar_lea.vmem %s1, %s237
      %p239 = scmp.lt.s32.totalorder %s15, 1
      %s240 = scalar_select %p239, %s15, 1
      %s241 = smul.addr %s240, 4
      %s242 = smul.addr %s241, 4
      %s243 = scalar_lea.vmem %s2, %s242
      %p244 = scmp.lt.s32.totalorder %s15, 1
      %s245 = scalar_select %p244, %s15, 1
      %s246 = scalar_lea.vmem %s3, %s245
      %p247 = scmp.lt.s32.totalorder %s15, 1
      %s248 = scalar_select %p247, %s15, 1
      %s249 = smul.addr %s248, 4
      %s250 = smul.addr %s249, 4
      %s251 = scalar_lea.vmem %s4, %s250
      %v253 = vld [vmem:[%s233] sm:$0xf]
      %v254 = vld [vmem:[%s233 + $0x4] sm:$0xf]
      %v255 = vld [vmem:[%s233 + $0x8] sm:$0xf]
      %v256 = vld [vmem:[%s233 + $0xc] sm:$0xf]
      %v257 = vld [vmem:[%s238] sm:$0xf]
      %v258 = vld [vmem:[%s238 + $0x4] sm:$0xf]
      %v259 = vld [vmem:[%s238 + $0x8] sm:$0xf]
      %v260 = vld [vmem:[%s238 + $0xc] sm:$0xf]
      %v261 = vld [vmem:[%s243] sm:$0xf]
      %v262 = vld [vmem:[%s243 + $0x4] sm:$0xf]
      %v263 = vld [vmem:[%s243 + $0x8] sm:$0xf]
      %v264 = vld [vmem:[%s243 + $0xc] sm:$0xf]
      %v265 = vld [vmem:[%s246] sm:$0x1]
      %vm266 = vcmask 64512
      %v268 = vsel %vm266, %v253, 0
      %v271 = vsel %vm266, %v257, 0
      %273 = vmatprep.subr.bf16.mxu0 0
      %274 = vmatpush1.bf16.xpose.msra.mxu0 %v271
      %275 = vmatprep.subr.bf16.mxu0 0
      %276 = vmatpush1.bf16.xpose.msra.mxu0 0
      %277 = vmatprep.subr.bf16.mxu0 0
      %278 = vmatpush1.bf16.xpose.msra.mxu0 0
      %279 = vmatprep.subr.bf16.mxu0 0
      %280 = vmatpush1.bf16.xpose.msra.mxu0 0
      %281 = vmatprep.subr.bf16.mxu0 0
      %282 = vmatpush1.bf16.xpose.msra.mxu0 0
      %283 = vmatprep.subr.bf16.mxu0 0
      %284 = vmatpush1.bf16.xpose.msra.mxu0 0
      %285 = vmatprep.subr.bf16.mxu0 0
      %286 = vmatpush1.bf16.xpose.msra.mxu0 0
      %287 = vmatprep.subr.bf16.mxu0 0
      %288 = vmatpush1.bf16.xpose.msra.mxu0 0
      %289 = vmatprep.subr.bf16.mxu0 0
      %290 = vmatpush1.bf16.xpose.msra.mxu0 0
      %291 = vmatprep.subr.bf16.mxu0 0
      %292 = vmatpush1.bf16.xpose.msra.mxu0 0
      %293 = vmatprep.subr.bf16.mxu0 0
      %294 = vmatpush1.bf16.xpose.msra.mxu0 0
      %295 = vmatprep.subr.bf16.mxu0 0
      %296 = vmatpush1.bf16.xpose.msra.mxu0 0
      %297 = vmatprep.subr.bf16.mxu0 0
      %298 = vmatpush1.bf16.xpose.msra.mxu0 0
      %299 = vmatprep.subr.bf16.mxu0 0
      %300 = vmatpush1.bf16.xpose.msra.mxu0 0
      %301 = vmatprep.subr.bf16.mxu0 0
      %302 = vmatpush1.bf16.xpose.msra.mxu0 0
      %303 = vmatprep.subr.bf16.mxu0 0
      %304 = vmatpush1.bf16.xpose.msra.mxu0 0
      %305 = vmatprep.mubr.bf16.mxu0 0
      %306 = vmatmul.mubr.bf16.gmra.mrb[0].mxu0 %v268
      %v307 = vpop.f32.mrb[0].mxu0
      %v308 = vadd.f32 0.0, %v307
      %v309 = vpop.f32.mrb[0].mxu0
      %v310 = vpop.f32.mrb[0].mxu0
      %v311 = vpop.f32.mrb[0].mxu0
      %312 = vdwg.mxu0
      %v314 = vsel %vm266, %v254, 0
      %v317 = vsel %vm266, %v258, 0
      %319 = vmatprep.subr.bf16.mxu0 0
      %320 = vmatpush1.bf16.xpose.msra.mxu0 %v317
      %321 = vmatprep.subr.bf16.mxu0 0
      %322 = vmatpush1.bf16.xpose.msra.mxu0 0
      %323 = vmatprep.subr.bf16.mxu0 0
      %324 = vmatpush1.bf16.xpose.msra.mxu0 0
      %325 = vmatprep.subr.bf16.mxu0 0
      %326 = vmatpush1.bf16.xpose.msra.mxu0 0
      %327 = vmatprep.subr.bf16.mxu0 0
      %328 = vmatpush1.bf16.xpose.msra.mxu0 0
      %329 = vmatprep.subr.bf16.mxu0 0
      %330 = vmatpush1.bf16.xpose.msra.mxu0 0
      %331 = vmatprep.subr.bf16.mxu0 0
      %332 = vmatpush1.bf16.xpose.msra.mxu0 0
      %333 = vmatprep.subr.bf16.mxu0 0
      %334 = vmatpush1.bf16.xpose.msra.mxu0 0
      %335 = vmatprep.subr.bf16.mxu0 0
      %336 = vmatpush1.bf16.xpose.msra.mxu0 0
      %337 = vmatprep.subr.bf16.mxu0 0
      %338 = vmatpush1.bf16.xpose.msra.mxu0 0
      %339 = vmatprep.subr.bf16.mxu0 0
      %340 = vmatpush1.bf16.xpose.msra.mxu0 0
      %341 = vmatprep.subr.bf16.mxu0 0
      %342 = vmatpush1.bf16.xpose.msra.mxu0 0
      %343 = vmatprep.subr.bf16.mxu0 0
      %344 = vmatpush1.bf16.xpose.msra.mxu0 0
      %345 = vmatprep.subr.bf16.mxu0 0
      %346 = vmatpush1.bf16.xpose.msra.mxu0 0
      %347 = vmatprep.subr.bf16.mxu0 0
      %348 = vmatpush1.bf16.xpose.msra.mxu0 0
      %349 = vmatprep.subr.bf16.mxu0 0
      %350 = vmatpush1.bf16.xpose.msra.mxu0 0
      %351 = vmatprep.mubr.bf16.mxu0 0
      %352 = vmatmul.mubr.bf16.gmra.mrb[0].mxu0 %v314
      %v353 = vpop.f32.mrb[0].mxu0
      %v354 = vadd.f32 0.0, %v353
      %v355 = vpop.f32.mrb[0].mxu0
      %v356 = vpop.f32.mrb[0].mxu0
      %v357 = vpop.f32.mrb[0].mxu0
      %358 = vdwg.mxu0
      %v360 = vsel %vm266, %v255, 0
      %v363 = vsel %vm266, %v259, 0
      %365 = vmatprep.subr.bf16.mxu0 0
      %366 = vmatpush1.bf16.xpose.msra.mxu0 %v363
      %367 = vmatprep.subr.bf16.mxu0 0
      %368 = vmatpush1.bf16.xpose.msra.mxu0 0
      %369 = vmatprep.subr.bf16.mxu0 0
      %370 = vmatpush1.bf16.xpose.msra.mxu0 0
      %371 = vmatprep.subr.bf16.mxu0 0
      %372 = vmatpush1.bf16.xpose.msra.mxu0 0
      %373 = vmatprep.subr.bf16.mxu0 0
      %374 = vmatpush1.bf16.xpose.msra.mxu0 0
      %375 = vmatprep.subr.bf16.mxu0 0
      %376 = vmatpush1.bf16.xpose.msra.mxu0 0
      %377 = vmatprep.subr.bf16.mxu0 0
      %378 = vmatpush1.bf16.xpose.msra.mxu0 0
      %379 = vmatprep.subr.bf16.mxu0 0
      %380 = vmatpush1.bf16.xpose.msra.mxu0 0
      %381 = vmatprep.subr.bf16.mxu0 0
      %382 = vmatpush1.bf16.xpose.msra.mxu0 0
      %383 = vmatprep.subr.bf16.mxu0 0
      %384 = vmatpush1.bf16.xpose.msra.mxu0 0
      %385 = vmatprep.subr.bf16.mxu0 0
      %386 = vmatpush1.bf16.xpose.msra.mxu0 0
      %387 = vmatprep.subr.bf16.mxu0 0
      %388 = vmatpush1.bf16.xpose.msra.mxu0 0
      %389 = vmatprep.subr.bf16.mxu0 0
      %390 = vmatpush1.bf16.xpose.msra.mxu0 0
      %391 = vmatprep.subr.bf16.mxu0 0
      %392 = vmatpush1.bf16.xpose.msra.mxu0 0
      %393 = vmatprep.subr.bf16.mxu0 0
      %394 = vmatpush1.bf16.xpose.msra.mxu0 0
      %395 = vmatprep.subr.bf16.mxu0 0
      %396 = vmatpush1.bf16.xpose.msra.mxu0 0
      %397 = vmatprep.mubr.bf16.mxu0 0
      %398 = vmatmul.mubr.bf16.gmra.mrb[0].mxu0 %v360
      %v399 = vpop.f32.mrb[0].mxu0
      %v400 = vadd.f32 0.0, %v399
      %v401 = vpop.f32.mrb[0].mxu0
      %v402 = vpop.f32.mrb[0].mxu0
      %v403 = vpop.f32.mrb[0].mxu0
      %404 = vdwg.mxu0
      %v406 = vsel %vm266, %v256, 0
      %v409 = vsel %vm266, %v260, 0
      %411 = vmatprep.subr.bf16.mxu0 0
      %412 = vmatpush1.bf16.xpose.msra.mxu0 %v409
      %413 = vmatprep.subr.bf16.mxu0 0
      %414 = vmatpush1.bf16.xpose.msra.mxu0 0
      %415 = vmatprep.subr.bf16.mxu0 0
      %416 = vmatpush1.bf16.xpose.msra.mxu0 0
      %417 = vmatprep.subr.bf16.mxu0 0
      %418 = vmatpush1.bf16.xpose.msra.mxu0 0
      %419 = vmatprep.subr.bf16.mxu0 0
      %420 = vmatpush1.bf16.xpose.msra.mxu0 0
      %421 = vmatprep.subr.bf16.mxu0 0
      %422 = vmatpush1.bf16.xpose.msra.mxu0 0
      %423 = vmatprep.subr.bf16.mxu0 0
      %424 = vmatpush1.bf16.xpose.msra.mxu0 0
      %425 = vmatprep.subr.bf16.mxu0 0
      %426 = vmatpush1.bf16.xpose.msra.mxu0 0
      %427 = vmatprep.subr.bf16.mxu0 0
      %428 = vmatpush1.bf16.xpose.msra.mxu0 0
      %429 = vmatprep.subr.bf16.mxu0 0
      %430 = vmatpush1.bf16.xpose.msra.mxu0 0
      %431 = vmatprep.subr.bf16.mxu0 0
      %432 = vmatpush1.bf16.xpose.msra.mxu0 0
      %433 = vmatprep.subr.bf16.mxu0 0
      %434 = vmatpush1.bf16.xpose.msra.mxu0 0
      %435 = vmatprep.subr.bf16.mxu0 0
      %436 = vmatpush1.bf16.xpose.msra.mxu0 0
      %437 = vmatprep.subr.bf16.mxu0 0
      %438 = vmatpush1.bf16.xpose.msra.mxu0 0
      %439 = vmatprep.subr.bf16.mxu0 0
      %440 = vmatpush1.bf16.xpose.msra.mxu0 0
      %441 = vmatprep.subr.bf16.mxu0 0
      %442 = vmatpush1.bf16.xpose.msra.mxu0 0
      %443 = vmatprep.mubr.bf16.mxu0 0
      %444 = vmatmul.mubr.bf16.gmra.mrb[0].mxu0 %v406
      %v445 = vpop.f32.mrb[0].mxu0
      %v446 = vadd.f32 0.0, %v445
      %v447 = vpop.f32.mrb[0].mxu0
      %v448 = vpop.f32.mrb[0].mxu0
      %v449 = vpop.f32.mrb[0].mxu0
      %450 = vdwg.mxu0
      %v451 = vmul.f32 %v308, 0.35355338
      %v452 = vmul.f32 %v354, 0.35355338
      %v453 = vmul.f32 %v400, 0.35355338
      %v454 = vmul.f32 %v446, 0.35355338
      %v456 = vlaneseq
      %v457 = vshrl.u32 %v456, 7
      %v458 = vsub.s32 0, %v457
      %v459 = vrot.slane %v265, %v458
      %v461 = vadd.f32 %v451, %v459
      %v462 = vadd.f32 %v452, %v459
      %v463 = vadd.f32 %v453, %v459
      %v464 = vadd.f32 %v454, %v459
      %v465 = vsel %vm266, %v461, -inf
      %466 = vmax.xlane.f32.xlu0 %v465
      %v467 = vpop.xlane.xlu0 %466
      %v468 = vsel %vm266, %v462, -inf
      %469 = vmax.xlane.f32.xlu0 %v468
      %v470 = vpop.xlane.xlu0 %469
      %v471 = vsel %vm266, %v463, -inf
      %472 = vmax.xlane.f32.xlu0 %v471
      %v473 = vpop.xlane.xlu0 %472
      %v474 = vsel %vm266, %v464, -inf
      %475 = vmax.xlane.f32.xlu0 %v474
      %v476 = vpop.xlane.xlu0 %475
      %v477 = vsub.f32 %v461, %v467
      %v478 = vsub.f32 %v462, %v470
      %v479 = vsub.f32 %v463, %v473
      %v480 = vsub.f32 %v464, %v476
      %v481 = vmul.f32 %v477, 1.442695
      %v482 = vpow.pop %v481
      %v483 = vmul.f32 %v478, 1.442695
      %v484 = vpow.pop %v483
      %v485 = vmul.f32 %v479, 1.442695
      %v486 = vpow.pop %v485
      %v487 = vmul.f32 %v480, 1.442695
      %v488 = vpow.pop %v487
      %v489 = vsel %vm266, %v482, 0.0
      %490 = vadd.xlane.f32.xlu0 %v489
      %v491 = vpop.xlane.xlu0 %490
      %v492 = vsel %vm266, %v484, 0.0
      %493 = vadd.xlane.f32.xlu0 %v492
      %v494 = vpop.xlane.xlu0 %493
      %v495 = vsel %vm266, %v486, 0.0
      %496 = vadd.xlane.f32.xlu0 %v495
      %v497 = vpop.xlane.xlu0 %496
      %v498 = vsel %vm266, %v488, 0.0
      %499 = vadd.xlane.f32.xlu0 %v498
      %v500 = vpop.xlane.xlu0 %499
      %v501 = vrcp.pop %v491
      %v502 = vrcp.pop %v494
      %v503 = vrcp.pop %v497
      %v504 = vrcp.pop %v500
      %v505 = vmul.f32 %v482, %v501
      %v506 = vmul.f32 %v484, %v502
      %v507 = vmul.f32 %v486, %v503
      %v508 = vmul.f32 %v488, %v504
      %v509 = vpack.c.bf16 %v505, %v505
      %v510 = vpack.c.bf16 %v506, %v506
      %v511 = vpack.c.bf16 %v507, %v507
      %v512 = vpack.c.bf16 %v508, %v508
      %v514 = vsel %vm266, %v509, 0
      %vm516 = vcmask 1043456
      %v518 = vsel %vm516, %v261, 0
      %520 = vmatprep.subr.bf16.mxu0 0
      %521 = vmatpush1.bf16.msra.mxu0 %v518
      %522 = vmatprep.subr.bf16.mxu0 0
      %523 = vmatpush1.bf16.msra.mxu0 0
      %524 = vmatprep.subr.bf16.mxu0 0
      %525 = vmatpush1.bf16.msra.mxu0 0
      %526 = vmatprep.subr.bf16.mxu0 0
      %527 = vmatpush1.bf16.msra.mxu0 0
      %528 = vmatprep.subr.bf16.mxu0 0
      %529 = vmatpush1.bf16.msra.mxu0 0
      %530 = vmatprep.subr.bf16.mxu0 0
      %531 = vmatpush1.bf16.msra.mxu0 0
      %532 = vmatprep.subr.bf16.mxu0 0
      %533 = vmatpush1.bf16.msra.mxu0 0
      %534 = vmatprep.subr.bf16.mxu0 0
      %535 = vmatpush1.bf16.msra.mxu0 0
      %536 = vmatprep.subr.bf16.mxu0 0
      %537 = vmatpush1.bf16.msra.mxu0 0
      %538 = vmatprep.subr.bf16.mxu0 0
      %539 = vmatpush1.bf16.msra.mxu0 0
      %540 = vmatprep.subr.bf16.mxu0 0
      %541 = vmatpush1.bf16.msra.mxu0 0
      %542 = vmatprep.subr.bf16.mxu0 0
      %543 = vmatpush1.bf16.msra.mxu0 0
      %544 = vmatprep.subr.bf16.mxu0 0
      %545 = vmatpush1.bf16.msra.mxu0 0
      %546 = vmatprep.subr.bf16.mxu0 0
      %547 = vmatpush1.bf16.msra.mxu0 0
      %548 = vmatprep.subr.bf16.mxu0 0
      %549 = vmatpush1.bf16.msra.mxu0 0
      %550 = vmatprep.subr.bf16.mxu0 0
      %551 = vmatpush1.bf16.msra.mxu0 0
      %552 = vmatprep.mubr.bf16.mxu0 0
      %553 = vmatmul.mubr.bf16.gmra.mrb[0].mxu0 %v514
      %v554 = vpop.f32.mrb[0].mxu0
      %v555 = vadd.f32 0.0, %v554
      %v556 = vpop.f32.mrb[0].mxu0
      %v557 = vpop.f32.mrb[0].mxu0
      %v558 = vpop.f32.mrb[0].mxu0
      %559 = vdwg.mxu0
      %v561 = vsel %vm266, %v510, 0
      %v564 = vsel %vm516, %v262, 0
      %566 = vmatprep.subr.bf16.mxu0 0
      %567 = vmatpush1.bf16.msra.mxu0 %v564
      %568 = vmatprep.subr.bf16.mxu0 0
      %569 = vmatpush1.bf16.msra.mxu0 0
      %570 = vmatprep.subr.bf16.mxu0 0
      %571 = vmatpush1.bf16.msra.mxu0 0
      %572 = vmatprep.subr.bf16.mxu0 0
      %573 = vmatpush1.bf16.msra.mxu0 0
      %574 = vmatprep.subr.bf16.mxu0 0
      %575 = vmatpush1.bf16.msra.mxu0 0
      %576 = vmatprep.subr.bf16.mxu0 0
      %577 = vmatpush1.bf16.msra.mxu0 0
      %578 = vmatprep.subr.bf16.mxu0 0
      %579 = vmatpush1.bf16.msra.mxu0 0
      %580 = vmatprep.subr.bf16.mxu0 0
      %581 = vmatpush1.bf16.msra.mxu0 0
      %582 = vmatprep.subr.bf16.mxu0 0
      %583 = vmatpush1.bf16.msra.mxu0 0
      %584 = vmatprep.subr.bf16.mxu0 0
      %585 = vmatpush1.bf16.msra.mxu0 0
      %586 = vmatprep.subr.bf16.mxu0 0
      %587 = vmatpush1.bf16.msra.mxu0 0
      %588 = vmatprep.subr.bf16.mxu0 0
      %589 = vmatpush1.bf16.msra.mxu0 0
      %590 = vmatprep.subr.bf16.mxu0 0
      %591 = vmatpush1.bf16.msra.mxu0 0
      %592 = vmatprep.subr.bf16.mxu0 0
      %593 = vmatpush1.bf16.msra.mxu0 0
      %594 = vmatprep.subr.bf16.mxu0 0
      %595 = vmatpush1.bf16.msra.mxu0 0
      %596 = vmatprep.subr.bf16.mxu0 0
      %597 = vmatpush1.bf16.msra.mxu0 0
      %598 = vmatprep.mubr.bf16.mxu0 0
      %599 = vmatmul.mubr.bf16.gmra.mrb[0].mxu0 %v561
      %v600 = vpop.f32.mrb[0].mxu0
      %v601 = vadd.f32 0.0, %v600
      %v602 = vpop.f32.mrb[0].mxu0
      %v603 = vpop.f32.mrb[0].mxu0
      %v604 = vpop.f32.mrb[0].mxu0
      %605 = vdwg.mxu0
      %v607 = vsel %vm266, %v511, 0
      %v610 = vsel %vm516, %v263, 0
      %612 = vmatprep.subr.bf16.mxu0 0
      %613 = vmatpush1.bf16.msra.mxu0 %v610
      %614 = vmatprep.subr.bf16.mxu0 0
      %615 = vmatpush1.bf16.msra.mxu0 0
      %616 = vmatprep.subr.bf16.mxu0 0
      %617 = vmatpush1.bf16.msra.mxu0 0
      %618 = vmatprep.subr.bf16.mxu0 0
      %619 = vmatpush1.bf16.msra.mxu0 0
      %620 = vmatprep.subr.bf16.mxu0 0
      %621 = vmatpush1.bf16.msra.mxu0 0
      %622 = vmatprep.subr.bf16.mxu0 0
      %623 = vmatpush1.bf16.msra.mxu0 0
      %624 = vmatprep.subr.bf16.mxu0 0
      %625 = vmatpush1.bf16.msra.mxu0 0
      %626 = vmatprep.subr.bf16.mxu0 0
      %627 = vmatpush1.bf16.msra.mxu0 0
      %628 = vmatprep.subr.bf16.mxu0 0
      %629 = vmatpush1.bf16.msra.mxu0 0
      %630 = vmatprep.subr.bf16.mxu0 0
      %631 = vmatpush1.bf16.msra.mxu0 0
      %632 = vmatprep.subr.bf16.mxu0 0
      %633 = vmatpush1.bf16.msra.mxu0 0
      %634 = vmatprep.subr.bf16.mxu0 0
      %635 = vmatpush1.bf16.msra.mxu0 0
      %636 = vmatprep.subr.bf16.mxu0 0
      %637 = vmatpush1.bf16.msra.mxu0 0
      %638 = vmatprep.subr.bf16.mxu0 0
      %639 = vmatpush1.bf16.msra.mxu0 0
      %640 = vmatprep.subr.bf16.mxu0 0
      %641 = vmatpush1.bf16.msra.mxu0 0
      %642 = vmatprep.subr.bf16.mxu0 0
      %643 = vmatpush1.bf16.msra.mxu0 0
      %644 = vmatprep.mubr.bf16.mxu0 0
      %645 = vmatmul.mubr.bf16.gmra.mrb[0].mxu0 %v607
      %v646 = vpop.f32.mrb[0].mxu0
      %v647 = vadd.f32 0.0, %v646
      %v648 = vpop.f32.mrb[0].mxu0
      %v649 = vpop.f32.mrb[0].mxu0
      %v650 = vpop.f32.mrb[0].mxu0
      %651 = vdwg.mxu0
      %v653 = vsel %vm266, %v512, 0
      %v656 = vsel %vm516, %v264, 0
      %658 = vmatprep.subr.bf16.mxu0 0
      %659 = vmatpush1.bf16.msra.mxu0 %v656
      %660 = vmatprep.subr.bf16.mxu0 0
      %661 = vmatpush1.bf16.msra.mxu0 0
      %662 = vmatprep.subr.bf16.mxu0 0
      %663 = vmatpush1.bf16.msra.mxu0 0
      %664 = vmatprep.subr.bf16.mxu0 0
      %665 = vmatpush1.bf16.msra.mxu0 0
      %666 = vmatprep.subr.bf16.mxu0 0
      %667 = vmatpush1.bf16.msra.mxu0 0
      %668 = vmatprep.subr.bf16.mxu0 0
      %669 = vmatpush1.bf16.msra.mxu0 0
      %670 = vmatprep.subr.bf16.mxu0 0
      %671 = vmatpush1.bf16.msra.mxu0 0
      %672 = vmatprep.subr.bf16.mxu0 0
      %673 = vmatpush1.bf16.msra.mxu0 0
      %674 = vmatprep.subr.bf16.mxu0 0
      %675 = vmatpush1.bf16.msra.mxu0 0
      %676 = vmatprep.subr.bf16.mxu0 0
      %677 = vmatpush1.bf16.msra.mxu0 0
      %678 = vmatprep.subr.bf16.mxu0 0
      %679 = vmatpush1.bf16.msra.mxu0 0
      %680 = vmatprep.subr.bf16.mxu0 0
      %681 = vmatpush1.bf16.msra.mxu0 0
      %682 = vmatprep.subr.bf16.mxu0 0
      %683 = vmatpush1.bf16.msra.mxu0 0
      %684 = vmatprep.subr.bf16.mxu0 0
      %685 = vmatpush1.bf16.msra.mxu0 0
      %686 = vmatprep.subr.bf16.mxu0 0
      %687 = vmatpush1.bf16.msra.mxu0 0
      %688 = vmatprep.subr.bf16.mxu0 0
      %689 = vmatpush1.bf16.msra.mxu0 0
      %690 = vmatprep.mubr.bf16.mxu0 0
      %691 = vmatmul.mubr.bf16.gmra.mrb[0].mxu0 %v653
      %v692 = vpop.f32.mrb[0].mxu0
      %v693 = vadd.f32 0.0, %v692
      %v694 = vpop.f32.mrb[0].mxu0
      %v695 = vpop.f32.mrb[0].mxu0
      %v696 = vpop.f32.mrb[0].mxu0
      %697 = vdwg.mxu0
      %v698 = vpack.c.bf16 %v555, %v555
      %v699 = vpack.c.bf16 %v601, %v601
      %v700 = vpack.c.bf16 %v647, %v647
      %v701 = vpack.c.bf16 %v693, %v693
      %vm702 = vcmask 60416
      %703 = vst.msk [vmem:[%s251] sm:$0xf] %vm702, %v698
      %704 = vst.msk [vmem:[%s251 + $0x4] sm:$0xf] %vm702, %v699
      %705 = vst.msk [vmem:[%s251 + $0x8] sm:$0xf] %vm702, %v700
      %706 = vst.msk [vmem:[%s251 + $0xc] sm:$0xf] %vm702, %v701
      %p707 = scmp.lt.s32.totalorder %s15, 1
      %s708 = scalar_select %p707, %s15, 1
      %s709 = smul.addr %s708, 4
      %s710 = smul.addr %s709, 4
      %s711 = scalar_lea.vmem %s4, %s710
      // Predicated region
      $region37: #{text_encoder_forward.13} parent=35 // pred_check
        %p712 = pneg %p137
      $region38: #{text_encoder_forward.13} parent=35 // pred_check_branch
        %714 = sbr.rel (%p712) target = $region40
      $region39: #{text_encoder_forward.13} parent=35 // pred_region
        _
      $region40: #{text_encoder_forward.13} parent=35 // pred_fallthru
        _
    $region36: #{text_encoder_forward.13} parent=5 // pred_fallthru
      _
    %p715 = scmp.le.s32.totalorder 2, %s10
    // Predicated region
    $region41: #{text_encoder_forward.13} parent=5 // pred_check
      %p716 = pneg %p715
    $region42: #{text_encoder_forward.13} parent=5 // pred_check_branch
      %718 = sbr.rel (%p716) target = $region44
    $region43: #{text_encoder_forward.13} parent=5 // pred_region
      %s719 = ssub.s32 %s10, 2
      // Predicated region
      $region45: #{text_encoder_forward.13} parent=43 // pred_check
        %p720 = pneg %p143
      $region46: #{text_encoder_forward.13} parent=43 // pred_check_branch
        %722 = sbr.rel (%p720) target = $region48
      $region47: #{text_encoder_forward.13} parent=43 // pred_region
        %p723 = scmp.lt.s32.totalorder %s16, 1
        %s724 = scalar_select %p723, %s16, 1
        %s725 = smul.addr %s724, 4
        %s726 = smul.addr %s725, 4
        %s727 = scalar_lea.vmem %s4, %s726
      $region48: #{text_encoder_forward.13} parent=43 // pred_fallthru
        _
    $region44: #{text_encoder_forward.13} parent=5 // pred_fallthru
      _
  $region6: #{text_encoder_forward.13} parent=0 // loop_footer
    %s14 = sadd.s32 1, %s10
  $region7: #{text_encoder_forward.13} parent=0 // loop_footer_branch
    %9 = sbr.rel target = $region3
  $region8: #{text_encoder_forward.13} parent=0 // loop_exit
    _

// kernel: text_encoder_forward.14
$region0: #{text_encoder_forward.14}
  #allocation0 [shape = 'u32[]', space=smem, size = 0x4, offset = 0x4, fixed_abs, tag = 'smem constant byte address 0x4 - core index']
  #allocation1 [shape = 'u32[144,128]{1,0:T(1,128)}', space=vmem, size = 0x12000, scoped, tag = 'internal scratch']
  #allocation2 [shape = 'f32[16,32]{1,0:T(8,128)}', space=vmem, size = 0x2000, scoped, tag = 'scratch operand']
  %s0 = inlined_call_operand.vmem [shape: bf16[16,32], index: 0, kind: input, shape index: {}]
  %s1 = inlined_call_operand.vmem [shape: bf16[32,32], index: 1, kind: input, shape index: {}]
  %s2 = inlined_call_operand.vmem [shape: f32[1,32], index: 2, kind: input, shape index: {}]
  %s3 = inlined_call_operand.vmem [shape: bf16[16,32], index: 3, kind: input, shape index: {}]
  %s4 = inlined_call_operand.vmem [shape: f32[1,32], index: 4, kind: input, shape index: {}]
  %s5 = inlined_call_operand.vmem [shape: f32[1,32], index: 5, kind: input, shape index: {}]
  %s6 = inlined_call_operand.vmem [shape: bf16[16,32], index: 6, kind: output, shape index: {}]
  %s7 = sld [smem:[#allocation0]]
  $region42: #{text_encoder_forward.14} parent=0
    _
  %s9 = ssub.s32 1, %s7
  %s10 = scalar_select 0, %s9, %s7
  // Predicated region
  $region2: #{text_encoder_forward.14} parent=0 // pred_check
    _
  $region3: #{text_encoder_forward.14} parent=0 // pred_check_branch
    %12 = sbr.rel (0) target = $region5
  $region4: #{text_encoder_forward.14} parent=0 // pred_region
    _
  $region5: #{text_encoder_forward.14} parent=0 // pred_fallthru
    _
  // Predicated region
  $region6: #{text_encoder_forward.14} parent=0 // pred_check
    _
  $region7: #{text_encoder_forward.14} parent=0 // pred_check_branch
    %14 = sbr.rel (0) target = $region9
  $region8: #{text_encoder_forward.14} parent=0 // pred_region
    _
  $region9: #{text_encoder_forward.14} parent=0 // pred_fallthru
    _
  // Predicated region
  $region10: #{text_encoder_forward.14} parent=0 // pred_check
    _
  $region11: #{text_encoder_forward.14} parent=0 // pred_check_branch
    %16 = sbr.rel (0) target = $region13
  $region12: #{text_encoder_forward.14} parent=0 // pred_region
    _
  $region13: #{text_encoder_forward.14} parent=0 // pred_fallthru
    _
  // Predicated region
  $region14: #{text_encoder_forward.14} parent=0 // pred_check
    _
  $region15: #{text_encoder_forward.14} parent=0 // pred_check_branch
    %18 = sbr.rel (0) target = $region17
  $region16: #{text_encoder_forward.14} parent=0 // pred_region
    _
  $region17: #{text_encoder_forward.14} parent=0 // pred_fallthru
    _
  // Predicated region
  $region18: #{text_encoder_forward.14} parent=0 // pred_check
    _
  $region19: #{text_encoder_forward.14} parent=0 // pred_check_branch
    %20 = sbr.rel (0) target = $region21
  $region20: #{text_encoder_forward.14} parent=0 // pred_region
    _
  $region21: #{text_encoder_forward.14} parent=0 // pred_fallthru
    _
  // Predicated region
  $region22: #{text_encoder_forward.14} parent=0 // pred_check
    _
  $region23: #{text_encoder_forward.14} parent=0 // pred_check_branch
    %22 = sbr.rel (0) target = $region25
  $region24: #{text_encoder_forward.14} parent=0 // pred_region
    _
  $region25: #{text_encoder_forward.14} parent=0 // pred_fallthru
    _
  %p24 = scmp.eq.s32.totalorder 0, 0
  // Predicated region
  $region26: #{text_encoder_forward.14} parent=0 // pred_check
    %p25 = pneg %p24
  $region27: #{text_encoder_forward.14} parent=0 // pred_check_branch
    %27 = sbr.rel (%p25) target = $region29
  $region28: #{text_encoder_forward.14} parent=0 // pred_region
    %vm28 = vcmask 261120
    %29 = vst.msk [vmem:[#allocation2] sm:$0xff] %vm28, 0.0
    %30 = vst.msk [vmem:[#allocation2 + $0x8] sm:$0xff] %vm28, 0.0
  $region29: #{text_encoder_forward.14} parent=0 // pred_fallthru
    _
  %v31 = vld [vmem:[#allocation2] sm:$0xff]
  %v32 = vld [vmem:[#allocation2 + $0x8] sm:$0xff]
  %v33 = vld [vmem:[%s0] sm:$0xf]
  %v34 = vld [vmem:[%s0 + $0x4] sm:$0xf]
  %v35 = vld [vmem:[%s1] sm:$0xf]
  %v36 = vld [vmem:[%s1 + $0x4] sm:$0xf]
  %v37 = vld [vmem:[%s1 + $0x8] sm:$0xf]
  %v38 = vld [vmem:[%s1 + $0xc] sm:$0xf]
  %v41 = vunpack.c.l.b16 %v33
  %v42 = vunpack.c.l.b16 %v34
  %v43 = vpack.c.b16 %v42, %v41
  %v48 = vunpack.c.l.b16 %v35
  %v49 = vunpack.c.l.b16 %v36
  %v50 = vunpack.c.l.b16 %v37
  %v51 = vunpack.c.l.b16 %v38
  %v52 = vpack.c.b16 %v49, %v48
  %v53 = vpack.c.b16 %v51, %v50
  %vm56 = vcmask 261120
  %v58 = vsel %vm56, %v43, 0
  %60 = vmatprep.subr.bf16.mxu0 0
  %61 = vmatpush1.bf16.msra.mxu0 %v52
  %62 = vmatprep.subr.bf16.mxu0 0
  %63 = vmatpush1.bf16.msra.mxu0 %v53
  %64 = vmatprep.subr.bf16.mxu0 0
  %65 = vmatpush1.bf16.msra.mxu0 0
  %66 = vmatprep.subr.bf16.mxu0 0
  %67 = vmatpush1.bf16.msra.mxu0 0
  %68 = vmatprep.subr.bf16.mxu0 0
  %69 = vmatpush1.bf16.msra.mxu0 0
  %70 = vmatprep.subr.bf16.mxu0 0
  %71 = vmatpush1.bf16.msra.mxu0 0
  %72 = vmatprep.subr.bf16.mxu0 0
  %73 = vmatpush1.bf16.msra.mxu0 0
  %74 = vmatprep.subr.bf16.mxu0 0
  %75 = vmatpush1.bf16.msra.mxu0 0
  %76 = vmatprep.subr.bf16.mxu0 0
  %77 = vmatpush1.bf16.msra.mxu0 0
  %78 = vmatprep.subr.bf16.mxu0 0
  %79 = vmatpush1.bf16.msra.mxu0 0
  %80 = vmatprep.subr.bf16.mxu0 0
  %81 = vmatpush1.bf16.msra.mxu0 0
  %82 = vmatprep.subr.bf16.mxu0 0
  %83 = vmatpush1.bf16.msra.mxu0 0
  %84 = vmatprep.subr.bf16.mxu0 0
  %85 = vmatpush1.bf16.msra.mxu0 0
  %86 = vmatprep.subr.bf16.mxu0 0
  %87 = vmatpush1.bf16.msra.mxu0 0
  %88 = vmatprep.subr.bf16.mxu0 0
  %89 = vmatpush1.bf16.msra.mxu0 0
  %90 = vmatprep.subr.bf16.mxu0 0
  %91 = vmatpush1.bf16.msra.mxu0 0
  %92 = vmatprep.mubr.bf16.mxu0 0
  %93 = vmatmul.mubr.bf16.gmra.mrb[0].mxu0 %v58
  %v94 = vpop.f32.mrb[0].mxu0
  %v95 = vadd.f32 0.0, %v94
  %v96 = vpop.f32.mrb[0].mxu0
  %v97 = vpop.f32.mrb[0].mxu0
  %v98 = vadd.f32 0.0, %v97
  %v99 = vpop.f32.mrb[0].mxu0
  %100 = vdwg.mxu0
  %v101 = vadd.f32 %v31, %v95
  %v102 = vadd.f32 %v32, %v98
  %103 = vst.msk [vmem:[#allocation2] sm:$0xff] %vm56, %v101
  %104 = vst.msk [vmem:[#allocation2 + $0x8] sm:$0xff] %vm56, %v102
  // Predicated region
  $region30: #{text_encoder_forward.14} parent=0 // pred_check
    %p105 = pneg %p24
  $region31: #{text_encoder_forward.14} parent=0 // pred_check_branch
    %107 = sbr.rel (%p105) target = $region33
  $region32: #{text_encoder_forward.14} parent=0 // pred_region
    %v108 = vld [vmem:[#allocation2] sm:$0xff]
    %v109 = vld [vmem:[#allocation2 + $0x8] sm:$0xff]
    %v110 = vld [vmem:[%s2] sm:$0x1]
    %v112 = vlaneseq
    %v113 = vshrl.u32 %v112, 7
    %v114 = vsub.s32 0, %v113
    %v115 = vrot.slane %v110, %v114
    %v117 = vadd.f32 %v108, %v115
    %v118 = vadd.f32 %v109, %v115
    %v119 = vld [vmem:[%s3] sm:$0xf]
    %v120 = vld [vmem:[%s3 + $0x4] sm:$0xf]
    %v121 = vunpack.c.l.bf16 %v119
    %v122 = vunpack.c.l.bf16 %v120
    %v123 = vadd.f32 %v117, %v121
    %v124 = vadd.f32 %v118, %v122
    %v125 = vsel %vm56, %v123, 0.0
    %126 = vadd.xlane.f32.xlu0 %v125
    %v127 = vpop.xlane.xlu0 %126
    %v128 = vsel %vm56, %v124, 0.0
    %129 = vadd.xlane.f32.xlu0 %v128
    %v130 = vpop.xlane.xlu0 %129
    %v131 = vrcp.pop 32.0
    %v132 = vmul.f32 %v127, %v131
    %v133 = vmul.f32 %v130, %v131
    %v134 = vsub.f32 %v123, %v132
    %v135 = vsub.f32 %v124, %v133
    %v136 = vmul.f32 %v134, %v134
    %v137 = vmul.f32 %v135, %v135
    %v138 = vsel %vm56, %v136, 0.0
    %139 = vadd.xlane.f32.xlu0 %v138
    %v140 = vpop.xlane.xlu0 %139
    %v141 = vsel %vm56, %v137, 0.0
    %142 = vadd.xlane.f32.xlu0 %v141
    %v143 = vpop.xlane.xlu0 %142
    %v144 = vmul.f32 %v140, %v131
    %v145 = vmul.f32 %v143, %v131
    %v146 = vadd.f32 %v144, 1e-12
    %v147 = vadd.f32 %v145, 1e-12
    %v148 = vrsqrt.pop %v146
    %v149 = vrsqrt.pop %v147
    %v150 = vmul.f32 %v134, %v148
    %v151 = vmul.f32 %v135, %v149
    %v152 = vld [vmem:[%s4] sm:$0x1]
    %v154 = vlaneseq
    %v155 = vshrl.u32 %v154, 7
    %v156 = vsub.s32 0, %v155
    %v157 = vrot.slane %v152, %v156
    %v159 = vmul.f32 %v150, %v157
    %v160 = vmul.f32 %v151, %v157
    %v161 = vld [vmem:[%s5] sm:$0x1]
    %v163 = vlaneseq
    %v164 = vshrl.u32 %v163, 7
    %v165 = vsub.s32 0, %v164
    %v166 = vrot.slane %v161, %v165
    %v168 = vadd.f32 %v159, %v166
    %v169 = vadd.f32 %v160, %v166
    %v170 = vpack.c.bf16 %v169, %v168
    %v172 = vunpack.c.l.b16 %v170
    %v173 = vunpack.c.h.b16 %v170
    %v174 = vpack.c.b16 %v172, %v172
    %v175 = vpack.c.b16 %v173, %v173
    %vm178 = vcmask 257024
    %179 = vst.msk [vmem:[%s6] sm:$0xf] %vm178, %v174
    %180 = vst.msk [vmem:[%s6 + $0x4] sm:$0xf] %vm178, %v175
  $region33: #{text_encoder_forward.14} parent=0 // pred_fallthru
    _
  // Predicated region
  $region34: #{text_encoder_forward.14} parent=0 // pred_check
    _
  $region35: #{text_encoder_forward.14} parent=0 // pred_check_branch
    %182 = sbr.rel (0) target = $region37
  $region36: #{text_encoder_forward.14} parent=0 // pred_region
    _
  $region37: #{text_encoder_forward.14} parent=0 // pred_fallthru
    _
  // Predicated region
  $region38: #{text_encoder_forward.14} parent=0 // pred_check
    _
  $region39: #{text_encoder_forward.14} parent=0 // pred_check_branch
    %184 = sbr.rel (0) target = $region41
  $region40: #{text_encoder_forward.14} parent=0 // pred_region
    _
  $region41: #{text_encoder_forward.14} parent=0 // pred_fallthru
    _

// kernel: text_encoder_forward.15
$region0: #{text_encoder_forward.15}
  #allocation0 [shape = 'u32[]', space=smem, size = 0x4, offset = 0x4, fixed_abs, tag = 'smem constant byte address 0x4 - core index']
  #allocation1 [shape = 'u32[144,128]{1,0:T(1,128)}', space=vmem, size = 0x12000, scoped, tag = 'internal scratch']
  #allocation2 [shape = 'f32[16,64]{1,0:T(8,128)}', space=vmem, size = 0x2000, scoped, tag = 'scratch operand']
  %s0 = inlined_call_operand.vmem [shape: bf16[16,32], index: 0, kind: input, shape index: {}]
  %s1 = inlined_call_operand.vmem [shape: bf16[32,64], index: 1, kind: input, shape index: {}]
  %s2 = inlined_call_operand.vmem [shape: f32[1,64], index: 2, kind: input, shape index: {}]
  %s3 = inlined_call_operand.vmem [shape: bf16[16,64], index: 3, kind: output, shape index: {}]
  %s4 = sld [smem:[#allocation0]]
  $region30: #{text_encoder_forward.15} parent=0
    _
  %s6 = ssub.s32 1, %s4
  %s7 = scalar_select 0, %s6, %s4
  // Predicated region
  $region2: #{text_encoder_forward.15} parent=0 // pred_check
    _
  $region3: #{text_encoder_forward.15} parent=0 // pred_check_branch
    %9 = sbr.rel (0) target = $region5
  $region4: #{text_encoder_forward.15} parent=0 // pred_region
    _
  $region5: #{text_encoder_forward.15} parent=0 // pred_fallthru
    _
  // Predicated region
  $region6: #{text_encoder_forward.15} parent=0 // pred_check
    _
  $region7: #{text_encoder_forward.15} parent=0 // pred_check_branch
    %11 = sbr.rel (0) target = $region9
  $region8: #{text_encoder_forward.15} parent=0 // pred_region
    _
  $region9: #{text_encoder_forward.15} parent=0 // pred_fallthru
    _
  // Predicated region
  $region10: #{text_encoder_forward.15} parent=0 // pred_check
    _
  $region11: #{text_encoder_forward.15} parent=0 // pred_check_branch
    %13 = sbr.rel (0) target = $region13
  $region12: #{text_encoder_forward.15} parent=0 // pred_region
    _
  $region13: #{text_encoder_forward.15} parent=0 // pred_fallthru
    _
  %p15 = scmp.eq.s32.totalorder 0, 0
  // Predicated region
  $region14: #{text_encoder_forward.15} parent=0 // pred_check
    %p16 = pneg %p15
  $region15: #{text_encoder_forward.15} parent=0 // pred_check_branch
    %18 = sbr.rel (%p16) target = $region17
  $region16: #{text_encoder_forward.15} parent=0 // pred_region
    %vm19 = vcmask 523264
    %20 = vst.msk [vmem:[#allocation2] sm:$0xff] %vm19, 0.0
    %21 = vst.msk [vmem:[#allocation2 + $0x8] sm:$0xff] %vm19, 0.0
  $region17: #{text_encoder_forward.15} parent=0 // pred_fallthru
    _
  %v22 = vld [vmem:[#allocation2] sm:$0xff]
  %v23 = vld [vmem:[#allocation2 + $0x8] sm:$0xff]
  %v24 = vld [vmem:[%s0] sm:$0xf]
  %v25 = vld [vmem:[%s0 + $0x4] sm:$0xf]
  %v26 = vld [vmem:[%s1] sm:$0xf]
  %v27 = vld [vmem:[%s1 + $0x4] sm:$0xf]
  %v28 = vld [vmem:[%s1 + $0x8] sm:$0xf]
  %v29 = vld [vmem:[%s1 + $0xc] sm:$0xf]
  %v32 = vunpack.c.l.b16 %v24
  %v33 = vunpack.c.l.b16 %v25
  %v34 = vpack.c.b16 %v33, %v32
  %v39 = vunpack.c.l.b16 %v26
  %v40 = vunpack.c.l.b16 %v27
  %v41 = vunpack.c.l.b16 %v28
  %v42 = vunpack.c.l.b16 %v29
  %v43 = vpack.c.b16 %v40, %v39
  %v44 = vpack.c.b16 %v42, %v41
  %vm47 = vcmask 261120
  %v49 = vsel %vm47, %v34, 0
  %51 = vmatprep.subr.bf16.mxu0 0
  %52 = vmatpush1.bf16.msra.mxu0 %v43
  %53 = vmatprep.subr.bf16.mxu0 0
  %54 = vmatpush1.bf16.msra.mxu0 %v44
  %55 = vmatprep.subr.bf16.mxu0 0
  %56 = vmatpush1.bf16.msra.mxu0 0
  %57 = vmatprep.subr.bf16.mxu0 0
  %58 = vmatpush1.bf16.msra.mxu0 0
  %59 = vmatprep.subr.bf16.mxu0 0
  %60 = vmatpush1.bf16.msra.mxu0 0
  %61 = vmatprep.subr.bf16.mxu0 0
  %62 = vmatpush1.bf16.msra.mxu0 0
  %63 = vmatprep.subr.bf16.mxu0 0
  %64 = vmatpush1.bf16.msra.mxu0 0
  %65 = vmatprep.subr.bf16.mxu0 0
  %66 = vmatpush1.bf16.msra.mxu0 0
  %67 = vmatprep.subr.bf16.mxu0 0
  %68 = vmatpush1.bf16.msra.mxu0 0
  %69 = vmatprep.subr.bf16.mxu0 0
  %70 = vmatpush1.bf16.msra.mxu0 0
  %71 = vmatprep.subr.bf16.mxu0 0
  %72 = vmatpush1.bf16.msra.mxu0 0
  %73 = vmatprep.subr.bf16.mxu0 0
  %74 = vmatpush1.bf16.msra.mxu0 0
  %75 = vmatprep.subr.bf16.mxu0 0
  %76 = vmatpush1.bf16.msra.mxu0 0
  %77 = vmatprep.subr.bf16.mxu0 0
  %78 = vmatpush1.bf16.msra.mxu0 0
  %79 = vmatprep.subr.bf16.mxu0 0
  %80 = vmatpush1.bf16.msra.mxu0 0
  %81 = vmatprep.subr.bf16.mxu0 0
  %82 = vmatpush1.bf16.msra.mxu0 0
  %83 = vmatprep.mubr.bf16.mxu0 0
  %84 = vmatmul.mubr.bf16.gmra.mrb[0].mxu0 %v49
  %v85 = vpop.f32.mrb[0].mxu0
  %v86 = vadd.f32 0.0, %v85
  %v87 = vpop.f32.mrb[0].mxu0
  %v88 = vpop.f32.mrb[0].mxu0
  %v89 = vadd.f32 0.0, %v88
  %v90 = vpop.f32.mrb[0].mxu0
  %91 = vdwg.mxu0
  %v92 = vadd.f32 %v22, %v86
  %v93 = vadd.f32 %v23, %v89
  %vm94 = vcmask 523264
  %95 = vst.msk [vmem:[#allocation2] sm:$0xff] %vm94, %v92
  %96 = vst.msk [vmem:[#allocation2 + $0x8] sm:$0xff] %vm94, %v93
  // Predicated region
  $region18: #{text_encoder_forward.15} parent=0 // pred_check
    %p97 = pneg %p15
  $region19: #{text_encoder_forward.15} parent=0 // pred_check_branch
    %99 = sbr.rel (%p97) target = $region21
  $region20: #{text_encoder_forward.15} parent=0 // pred_region
    %v100 = vld [vmem:[#allocation2] sm:$0xff]
    %v101 = vld [vmem:[#allocation2 + $0x8] sm:$0xff]
    %v102 = vld [vmem:[%s2] sm:$0x1]
    %v104 = vlaneseq
    %v105 = vshrl.u32 %v104, 7
    %v106 = vsub.s32 0, %v105
    %v107 = vrot.slane %v102, %v106
    %v109 = vadd.f32 %v100, %v107
    %v110 = vadd.f32 %v101, %v107
    %v111 = vmul.f32 %v109, 0.5
    %v112 = vmul.f32 %v110, 0.5
    %v113 = vmul.f32 %v109, 0.70710677
    %v114 = vmul.f32 %v110, 0.70710677
    %v115 = verf.f32.pop %v113
    %v116 = verf.f32.pop %v114
    %v117 = vadd.f32 %v115, 1.0
    %v118 = vadd.f32 %v116, 1.0
    %v119 = vmul.f32 %v111, %v117
    %v120 = vmul.f32 %v112, %v118
    %v121 = vpack.c.bf16 %v120, %v119
    %v123 = vunpack.c.l.b16 %v121
    %v124 = vunpack.c.h.b16 %v121
    %v125 = vpack.c.b16 %v123, %v123
    %v126 = vpack.c.b16 %v124, %v124
    %vm129 = vcmask 519168
    %130 = vst.msk [vmem:[%s3] sm:$0xf] %vm129, %v125
    %131 = vst.msk [vmem:[%s3 + $0x4] sm:$0xf] %vm129, %v126
  $region21: #{text_encoder_forward.15} parent=0 // pred_fallthru
    _
  // Predicated region
  $region22: #{text_encoder_forward.15} parent=0 // pred_check
    _
  $region23: #{text_encoder_forward.15} parent=0 // pred_check_branch
    %133 = sbr.rel (0) target = $region25
  $region24: #{text_encoder_forward.15} parent=0 // pred_region
    _
  $region25: #{text_encoder_forward.15} parent=0 // pred_fallthru
    _
  // Predicated region
  $region26: #{text_encoder_forward.15} parent=0 // pred_check
    _
  $region27: #{text_encoder_forward.15} parent=0 // pred_check_branch
    %135 = sbr.rel (0) target = $region29
  $region28: #{text_encoder_forward.15} parent=0 // pred_region
    _
  $region29: #{text_encoder_forward.15} parent=0 // pred_fallthru
    _

// kernel: text_encoder_forward.16
$region0: #{text_encoder_forward.16}
  #allocation0 [shape = 'u32[]', space=smem, size = 0x4, offset = 0x4, fixed_abs, tag = 'smem constant byte address 0x4 - core index']
  #allocation1 [shape = 'u32[144,128]{1,0:T(1,128)}', space=vmem, size = 0x12000, scoped, tag = 'internal scratch']
  #allocation2 [shape = 'f32[16,32]{1,0:T(8,128)}', space=vmem, size = 0x2000, scoped, tag = 'scratch operand']
  %s0 = inlined_call_operand.vmem [shape: bf16[16,64], index: 0, kind: input, shape index: {}]
  %s1 = inlined_call_operand.vmem [shape: bf16[64,32], index: 1, kind: input, shape index: {}]
  %s2 = inlined_call_operand.vmem [shape: f32[1,32], index: 2, kind: input, shape index: {}]
  %s3 = inlined_call_operand.vmem [shape: bf16[16,32], index: 3, kind: input, shape index: {}]
  %s4 = inlined_call_operand.vmem [shape: f32[1,32], index: 4, kind: input, shape index: {}]
  %s5 = inlined_call_operand.vmem [shape: f32[1,32], index: 5, kind: input, shape index: {}]
  %s6 = inlined_call_operand.vmem [shape: bf16[16,32], index: 6, kind: output, shape index: {}]
  %s7 = sld [smem:[#allocation0]]
  $region42: #{text_encoder_forward.16} parent=0
    _
  %s9 = ssub.s32 1, %s7
  %s10 = scalar_select 0, %s9, %s7
  // Predicated region
  $region2: #{text_encoder_forward.16} parent=0 // pred_check
    _
  $region3: #{text_encoder_forward.16} parent=0 // pred_check_branch
    %12 = sbr.rel (0) target = $region5
  $region4: #{text_encoder_forward.16} parent=0 // pred_region
    _
  $region5: #{text_encoder_forward.16} parent=0 // pred_fallthru
    _
  // Predicated region
  $region6: #{text_encoder_forward.16} parent=0 // pred_check
    _
  $region7: #{text_encoder_forward.16} parent=0 // pred_check_branch
    %14 = sbr.rel (0) target = $region9
  $region8: #{text_encoder_forward.16} parent=0 // pred_region
    _
  $region9: #{text_encoder_forward.16} parent=0 // pred_fallthru
    _
  // Predicated region
  $region10: #{text_encoder_forward.16} parent=0 // pred_check
    _
  $region11: #{text_encoder_forward.16} parent=0 // pred_check_branch
    %16 = sbr.rel (0) target = $region13
  $region12: #{text_encoder_forward.16} parent=0 // pred_region
    _
  $region13: #{text_encoder_forward.16} parent=0 // pred_fallthru
    _
  // Predicated region
  $region14: #{text_encoder_forward.16} parent=0 // pred_check
    _
  $region15: #{text_encoder_forward.16} parent=0 // pred_check_branch
    %18 = sbr.rel (0) target = $region17
  $region16: #{text_encoder_forward.16} parent=0 // pred_region
    _
  $region17: #{text_encoder_forward.16} parent=0 // pred_fallthru
    _
  // Predicated region
  $region18: #{text_encoder_forward.16} parent=0 // pred_check
    _
  $region19: #{text_encoder_forward.16} parent=0 // pred_check_branch
    %20 = sbr.rel (0) target = $region21
  $region20: #{text_encoder_forward.16} parent=0 // pred_region
    _
  $region21: #{text_encoder_forward.16} parent=0 // pred_fallthru
    _
  // Predicated region
  $region22: #{text_encoder_forward.16} parent=0 // pred_check
    _
  $region23: #{text_encoder_forward.16} parent=0 // pred_check_branch
    %22 = sbr.rel (0) target = $region25
  $region24: #{text_encoder_forward.16} parent=0 // pred_region
    _
  $region25: #{text_encoder_forward.16} parent=0 // pred_fallthru
    _
  %p24 = scmp.eq.s32.totalorder 0, 0
  // Predicated region
  $region26: #{text_encoder_forward.16} parent=0 // pred_check
    %p25 = pneg %p24
  $region27: #{text_encoder_forward.16} parent=0 // pred_check_branch
    %27 = sbr.rel (%p25) target = $region29
  $region28: #{text_encoder_forward.16} parent=0 // pred_region
    %vm28 = vcmask 261120
    %29 = vst.msk [vmem:[#allocation2] sm:$0xff] %vm28, 0.0
    %30 = vst.msk [vmem:[#allocation2 + $0x8] sm:$0xff] %vm28, 0.0
  $region29: #{text_encoder_forward.16} parent=0 // pred_fallthru
    _
  %v31 = vld [vmem:[#allocation2] sm:$0xff]
  %v32 = vld [vmem:[#allocation2 + $0x8] sm:$0xff]
  %v33 = vld [vmem:[%s0] sm:$0xf]
  %v34 = vld [vmem:[%s0 + $0x4] sm:$0xf]
  %v35 = vld [vmem:[%s1] sm:$0xf]
  %v36 = vld [vmem:[%s1 + $0x4] sm:$0xf]
  %v37 = vld [vmem:[%s1 + $0x8] sm:$0xf]
  %v38 = vld [vmem:[%s1 + $0xc] sm:$0xf]
  %v39 = vld [vmem:[%s1 + $0x10] sm:$0xf]
  %v40 = vld [vmem:[%s1 + $0x14] sm:$0xf]
  %v41 = vld [vmem:[%s1 + $0x18] sm:$0xf]
  %v42 = vld [vmem:[%s1 + $0x1c] sm:$0xf]
  %v45 = vunpack.c.l.b16 %v33
  %v46 = vunpack.c.l.b16 %v34
  %v47 = vpack.c.b16 %v46, %v45
  %v56 = vunpack.c.l.b16 %v35
  %v57 = vunpack.c.l.b16 %v36
  %v58 = vunpack.c.l.b16 %v37
  %v59 = vunpack.c.l.b16 %v38
  %v60 = vunpack.c.l.b16 %v39
  %v61 = vunpack.c.l.b16 %v40
  %v62 = vunpack.c.l.b16 %v41
  %v63 = vunpack.c.l.b16 %v42
  %v64 = vpack.c.b16 %v57, %v56
  %v65 = vpack.c.b16 %v59, %v58
  %v66 = vpack.c.b16 %v61, %v60
  %v67 = vpack.c.b16 %v63, %v62
  %vm72 = vcmask 523264
  %v74 = vsel %vm72, %v47, 0
  %76 = vmatprep.subr.bf16.mxu0 0
  %77 = vmatpush1.bf16.msra.mxu0 %v64
  %78 = vmatprep.subr.bf16.mxu0 0
  %79 = vmatpush1.bf16.msra.mxu0 %v65
  %80 = vmatprep.subr.bf16.mxu0 0
  %81 = vmatpush1.bf16.msra.mxu0 %v66
  %82 = vmatprep.subr.bf16.mxu0 0
  %83 = vmatpush1.bf16.msra.mxu0 %v67
  %84 = vmatprep.subr.bf16.mxu0 0
  %85 = vmatpush1.bf16.msra.mxu0 0
  %86 = vmatprep.subr.bf16.mxu0 0
  %87 = vmatpush1.bf16.msra.mxu0 0
  %88 = vmatprep.subr.bf16.mxu0 0
  %89 = vmatpush1.bf16.msra.mxu0 0
  %90 = vmatprep.subr.bf16.mxu0 0
  %91 = vmatpush1.bf16.msra.mxu0 0
  %92 = vmatprep.subr.bf16.mxu0 0
  %93 = vmatpush1.bf16.msra.mxu0 0
  %94 = vmatprep.subr.bf16.mxu0 0
  %95 = vmatpush1.bf16.msra.mxu0 0
  %96 = vmatprep.subr.bf16.mxu0 0
  %97 = vmatpush1.bf16.msra.mxu0 0
  %98 = vmatprep.subr.bf16.mxu0 0
  %99 = vmatpush1.bf16.msra.mxu0 0
  %100 = vmatprep.subr.bf16.mxu0 0
  %101 = vmatpush1.bf16.msra.mxu0 0
  %102 = vmatprep.subr.bf16.mxu0 0
  %103 = vmatpush1.bf16.msra.mxu0 0
  %104 = vmatprep.subr.bf16.mxu0 0
  %105 = vmatpush1.bf16.msra.mxu0 0
  %106 = vmatprep.subr.bf16.mxu0 0
  %107 = vmatpush1.bf16.msra.mxu0 0
  %108 = vmatprep.mubr.bf16.mxu0 0
  %109 = vmatmul.mubr.bf16.gmra.mrb[0].mxu0 %v74
  %v110 = vpop.f32.mrb[0].mxu0
  %v111 = vadd.f32 0.0, %v110
  %v112 = vpop.f32.mrb[0].mxu0
  %v113 = vpop.f32.mrb[0].mxu0
  %v114 = vadd.f32 0.0, %v113
  %v115 = vpop.f32.mrb[0].mxu0
  %116 = vdwg.mxu0
  %v117 = vadd.f32 %v31, %v111
  %v118 = vadd.f32 %v32, %v114
  %vm119 = vcmask 261120
  %120 = vst.msk [vmem:[#allocation2] sm:$0xff] %vm119, %v117
  %121 = vst.msk [vmem:[#allocation2 + $0x8] sm:$0xff] %vm119, %v118
  // Predicated region
  $region30: #{text_encoder_forward.16} parent=0 // pred_check
    %p122 = pneg %p24
  $region31: #{text_encoder_forward.16} parent=0 // pred_check_branch
    %124 = sbr.rel (%p122) target = $region33
  $region32: #{text_encoder_forward.16} parent=0 // pred_region
    %v125 = vld [vmem:[#allocation2] sm:$0xff]
    %v126 = vld [vmem:[#allocation2 + $0x8] sm:$0xff]
    %v127 = vld [vmem:[%s2] sm:$0x1]
    %v129 = vlaneseq
    %v130 = vshrl.u32 %v129, 7
    %v131 = vsub.s32 0, %v130
    %v132 = vrot.slane %v127, %v131
    %v134 = vadd.f32 %v125, %v132
    %v135 = vadd.f32 %v126, %v132
    %v136 = vld [vmem:[%s3] sm:$0xf]
    %v137 = vld [vmem:[%s3 + $0x4] sm:$0xf]
    %v138 = vunpack.c.l.bf16 %v136
    %v139 = vunpack.c.l.bf16 %v137
    %v140 = vadd.f32 %v134, %v138
    %v141 = vadd.f32 %v135, %v139
    %v142 = vsel %vm119, %v140, 0.0
    %143 = vadd.xlane.f32.xlu0 %v142
    %v144 = vpop.xlane.xlu0 %143
    %v145 = vsel %vm119, %v141, 0.0
    %146 = vadd.xlane.f32.xlu0 %v145
    %v147 = vpop.xlane.xlu0 %146
    %v148 = vrcp.pop 32.0
    %v149 = vmul.f32 %v144, %v148
    %v150 = vmul.f32 %v147, %v148
    %v151 = vsub.f32 %v140, %v149
    %v152 = vsub.f32 %v141, %v150
    %v153 = vmul.f32 %v151, %v151
    %v154 = vmul.f32 %v152, %v152
    %v155 = vsel %vm119, %v153, 0.0
    %156 = vadd.xlane.f32.xlu0 %v155
    %v157 = vpop.xlane.xlu0 %156
    %v158 = vsel %vm119, %v154, 0.0
    %159 = vadd.xlane.f32.xlu0 %v158
    %v160 = vpop.xlane.xlu0 %159
    %v161 = vmul.f32 %v157, %v148
    %v162 = vmul.f32 %v160, %v148
    %v163 = vadd.f32 %v161, 1e-12
    %v164 = vadd.f32 %v162, 1e-12
    %v165 = vrsqrt.pop %v163
    %v166 = vrsqrt.pop %v164
    %v167 = vmul.f32 %v151, %v165
    %v168 = vmul.f32 %v152, %v166
    %v169 = vld [vmem:[%s4] sm:$0x1]
    %v171 = vlaneseq
    %v172 = vshrl.u32 %v171, 7
    %v173 = vsub.s32 0, %v172
    %v174 = vrot.slane %v169, %v173
    %v176 = vmul.f32 %v167, %v174
    %v177 = vmul.f32 %v168, %v174
    %v178 = vld [vmem:[%s5] sm:$0x1]
    %v180 = vlaneseq
    %v181 = vshrl.u32 %v180, 7
    %v182 = vsub.s32 0, %v181
    %v183 = vrot.slane %v178, %v182
    %v185 = vadd.f32 %v176, %v183
    %v186 = vadd.f32 %v177, %v183
    %v187 = vpack.c.bf16 %v186, %v185
    %v189 = vunpack.c.l.b16 %v187
    %v190 = vunpack.c.h.b16 %v187
    %v191 = vpack.c.b16 %v189, %v189
    %v192 = vpack.c.b16 %v190, %v190
    %vm195 = vcmask 257024
    %196 = vst.msk [vmem:[%s6] sm:$0xf] %vm195, %v191
    %197 = vst.msk [vmem:[%s6 + $0x4] sm:$0xf] %vm195, %v192
  $region33: #{text_encoder_forward.16} parent=0 // pred_fallthru
    _
  // Predicated region
  $region34: #{text_encoder_forward.16} parent=0 // pred_check
    _
  $region35: #{text_encoder_forward.16} parent=0 // pred_check_branch
    %199 = sbr.rel (0) target = $region37
  $region36: #{text_encoder_forward.16} parent=0 // pred_region
    _
  $region37: #{text_encoder_forward.16} parent=0 // pred_fallthru
    _
  // Predicated region
  $region38: #{text_encoder_forward.16} parent=0 // pred_check
    _
  $region39: #{text_encoder_forward.16} parent=0 // pred_check_branch
    %201 = sbr.rel (0) target = $region41
  $region40: #{text_encoder_forward.16} parent=0 // pred_region
    _
  $region41: #{text_encoder_forward.16} parent=0 // pred_fallthru
    _

</llo_original>
